<compile_context>
chip_gen: v6e
topology: v6e:2x2x1
jax: 0.10.0
libtpu: 0.0.40
codegen_flags: <defaults>
</compile_context>

<pallas_src>
import jax
import jax.numpy as jnp
from jax.experimental import pallas as pl
from jax.experimental.pallas import tpu as pltpu

HIDDEN = 768       # args.classifier_hidden_size ('base' hidden size)
NUM_LABEL = 4      # num_label
LANE = 128         # lane-dense padded output width
MAX_TB = 256       # max batch tile per grid step (fills MXU M on v6e/v7x)


def _round_up(x, m):
    return ((x + m - 1) // m) * m


# ----------------------------------------------------------------------------
# Fused classifier kernel:
#   dropout(id) -> Linear(H,H) -> tanh -> dropout(id) -> Linear(H,num_label)
# ----------------------------------------------------------------------------
def classifier_kernel(x_ref, w1_ref, b1_ref, w2_ref, b2_ref, out_ref):
    # Dropout is identity at inference time.
    # TODO(synk): training-mode dropout (pltpu.prng_* masking) not implemented.
    h = jnp.dot(x_ref[...], w1_ref[...],                      # bf16 x bf16 -> f32 acc
                preferred_element_type=jnp.float32)
    h = jnp.tanh(h + b1_ref[...])                             # f32 bias + tanh (EUP)
    z = jnp.dot(h.astype(jnp.bfloat16), w2_ref[...],          # bf16 x bf16 -> f32 acc
                preferred_element_type=jnp.float32)
    out_ref[...] = z + b2_ref[...]                            # (TB, 128) lane-dense logits


def simple_classifier_forward(features, params):
    """features: (B, S, H) float32 -> logits (B, NUM_LABEL) float32."""
    B = features.shape[0]

    # Slice + bf16 cast fuse into one tiny XLA op: only B x H rows leave HBM,
    # and the activation DMA into the kernel is half-width (bf16).
    cls = features[:, 0, :].astype(jnp.bfloat16)              # x = features[:, 0, :]

    if B <= MAX_TB:
        # Whole batch in a single grid step (pad to a bf16-tile multiple of 16).
        b_pad = max(_round_up(B, 16), 16)
        tb = b_pad
    else:
        # Large batches: 256-row tiles, sharded across TensorCores ("parallel").
        tb = MAX_TB
        b_pad = _round_up(B, MAX_TB)

    if b_pad != B:
        cls = jnp.pad(cls, ((0, b_pad - B), (0, 0)))

    grid_m = b_pad // tb

    weight_bytes = (HIDDEN * HIDDEN + HIDDEN * LANE) * 2 + (HIDDEN + LANE) * 4
    act_bytes = b_pad * HIDDEN * 2 + b_pad * LANE * 4
    cost = pl.CostEstimate(
        flops=2 * b_pad * HIDDEN * (HIDDEN + LANE),
        transcendentals=b_pad * HIDDEN,
        bytes_accessed=weight_bytes + act_bytes,
    )

    out = pl.pallas_call(
        classifier_kernel,
        out_shape=jax.ShapeDtypeStruct((b_pad, LANE), jnp.float32),
        grid_spec=pltpu.PrefetchScalarGridSpec(
            num_scalar_prefetch=0,
            grid=(grid_m,),
            in_specs=[
                pl.BlockSpec((tb, HIDDEN), lambda i: (i, 0)),        # CLS rows (bf16)
                pl.BlockSpec((HIDDEN, HIDDEN), lambda i: (0, 0)),    # dense W (bf16, resident)
                pl.BlockSpec((1, HIDDEN), lambda i: (0, 0)),         # dense b (f32)
                pl.BlockSpec((HIDDEN, LANE), lambda i: (0, 0)),      # output W (bf16, padded)
                pl.BlockSpec((1, LANE), lambda i: (0, 0)),           # output b (f32, padded)
            ],
            out_specs=pl.BlockSpec((tb, LANE), lambda i: (i, 0)),
        ),
        compiler_params=pltpu.CompilerParams(
            dimension_semantics=("parallel",)),
        cost_estimate=cost,
    )(cls, params['w1_bf16'], params['b1'], params['w2_bf16'], params['b2_pad'])

    return out[:B, :NUM_LABEL]


# ----------------------------------------------------------------------------
# Parameter construction + plain-JAX reference (module semantics, f32)
# ----------------------------------------------------------------------------
def init_params(key):
    k1, k2, k3, k4 = jax.random.split(key, 4)
    n = lambda k, s: (0.02 * jax.random.normal(k, s)).astype(jnp.float32)
    # f32 master weights (module semantics); stored [in, out] so y = x @ W + b
    w1 = n(k1, (HIDDEN, HIDDEN))
    b1 = n(k2, (1, HIDDEN))
    w2 = n(k3, (HIDDEN, NUM_LABEL))
    b2 = n(k4, (1, NUM_LABEL))

    # Device-side params: bf16 weights, lane-dense padded output projection.
    w2_pad = jnp.zeros((HIDDEN, LANE), jnp.float32).at[:, :NUM_LABEL].set(w2)
    b2_pad = jnp.zeros((1, LANE), jnp.float32).at[:, :NUM_LABEL].set(b2)
    return {
        'w1': w1, 'b1': b1, 'w2': w2, 'b2': b2,                    # reference (f32)
        'w1_bf16': w1.astype(jnp.bfloat16),                        # kernel operands
        'w2_bf16': w2_pad.astype(jnp.bfloat16),
        'b2_pad': b2_pad,
    }


def reference_forward(features, p):
    x = features[:, 0, :]
    h = jnp.tanh(x @ p['w1'] + p['b1'])
    return h @ p['w2'] + p['b2']


if __name__ == "__main__":
    B, S = 2, 8
    key = jax.random.PRNGKey(0)
    k_feat, k_par = jax.random.split(key, 2)

    features = jax.random.normal(k_feat, (B, S, HIDDEN), jnp.float32)
    params = init_params(k_par)

    logits = simple_classifier_forward(features, params)
    jax.block_until_ready(logits)

    ref = reference_forward(features, params)
    assert logits.shape == (B, NUM_LABEL)
    # bf16 weights/activations are an intentional precision trade vs f32 ref.
    assert jnp.allclose(logits, ref, atol=2e-2, rtol=2e-2)
    print("KERNEL_OK")
</pallas_src>

<mosaic_0001>
module attributes {stable_mosaic.version = 11 : i64} {
  func.func @classifier_kernel(%arg0: i32, %arg1: memref<16x768xbf16, #tpu.memory_space<vmem>>, %arg2: memref<768x768xbf16, #tpu.memory_space<vmem>>, %arg3: memref<1x768xf32, #tpu.memory_space<vmem>>, %arg4: memref<768x128xbf16, #tpu.memory_space<vmem>>, %arg5: memref<1x128xf32, #tpu.memory_space<vmem>>, %arg6: memref<16x128xf32, #tpu.memory_space<vmem>>) attributes {dimension_semantics = [#tpu.dimension_semantics<parallel>], iteration_bounds = array<i64: 1>, scalar_prefetch = 0 : i64, scratch_operands = 0 : i64, tpu.core_type = #tpu.core_type<tc>, window_params = [{transform_indices = @transform_0, window_bounds = array<i64: 16, 768>}, {pipeline_mode = #tpu.pipeline_mode<synchronous>, transform_indices = @transform_1, window_bounds = array<i64: 768, 768>}, {pipeline_mode = #tpu.pipeline_mode<synchronous>, transform_indices = @transform_2, window_bounds = array<i64: 1, 768>}, {pipeline_mode = #tpu.pipeline_mode<synchronous>, transform_indices = @transform_3, window_bounds = array<i64: 768, 128>}, {pipeline_mode = #tpu.pipeline_mode<synchronous>, transform_indices = @transform_4, window_bounds = array<i64: 1, 128>}, {transform_indices = @transform_5, window_bounds = array<i64: 16, 128>}]} {
    %c0 = arith.constant 0 : index
    %c0_0 = arith.constant 0 : index
    %0 = vector.load %arg1[%c0, %c0_0] : memref<16x768xbf16, #tpu.memory_space<vmem>>, vector<16x768xbf16>
    %c0_1 = arith.constant 0 : index
    %c0_2 = arith.constant 0 : index
    %1 = vector.load %arg2[%c0_1, %c0_2] : memref<768x768xbf16, #tpu.memory_space<vmem>>, vector<768x768xbf16>
    %cst = arith.constant dense<0.000000e+00> : vector<16x768xf32>
    %2 = tpu.matmul %0, %1, %cst {dimension_numbers = #tpu.dot_dimension_numbers<[1], [0], [0], [1], [0, 0, 1, 1], [], []>} : vector<16x768xbf16>, vector<768x768xbf16>, vector<16x768xf32> -> vector<16x768xf32>
    %c0_3 = arith.constant 0 : index
    %c0_4 = arith.constant 0 : index
    %3 = vector.load %arg3[%c0_3, %c0_4] : memref<1x768xf32, #tpu.memory_space<vmem>>, vector<1x768xf32>
    %4 = vector.broadcast %3 : vector<1x768xf32> to vector<16x768xf32>
    %5 = arith.addf %2, %4 : vector<16x768xf32>
    %6 = math.tanh %5 : vector<16x768xf32>
    %7 = arith.truncf %6 : vector<16x768xf32> to vector<16x768xbf16>
    %c0_5 = arith.constant 0 : index
    %c0_6 = arith.constant 0 : index
    %8 = vector.load %arg4[%c0_5, %c0_6] : memref<768x128xbf16, #tpu.memory_space<vmem>>, vector<768x128xbf16>
    %cst_7 = arith.constant dense<0.000000e+00> : vector<16x128xf32>
    %9 = tpu.matmul %7, %8, %cst_7 {dimension_numbers = #tpu.dot_dimension_numbers<[1], [0], [0], [1], [0, 0, 1, 1], [], []>} : vector<16x768xbf16>, vector<768x128xbf16>, vector<16x128xf32> -> vector<16x128xf32>
    %c0_8 = arith.constant 0 : index
    %c0_9 = arith.constant 0 : index
    %10 = vector.load %arg5[%c0_8, %c0_9] : memref<1x128xf32, #tpu.memory_space<vmem>>, vector<1x128xf32>
    %11 = vector.broadcast %10 : vector<1x128xf32> to vector<16x128xf32>
    %12 = arith.addf %9, %11 : vector<16x128xf32>
    %c0_10 = arith.constant 0 : index
    %c0_11 = arith.constant 0 : index
    %13 = vector.load %arg6[%c0_10, %c0_11] : memref<16x128xf32, #tpu.memory_space<vmem>>, vector<16x128xf32>
    tpu.vector_store %arg6[%c0_10, %c0_11], %12 {strides = array<i32>} : memref<16x128xf32, #tpu.memory_space<vmem>>, vector<16x128xf32>,
    return
  }
  func.func @transform_0(%arg0: i32) -> (i32, i32) {
    %c0_i32 = arith.constant 0 : i32
    %c0_i32_0 = arith.constant 0 : i32
    return %arg0, %c0_i32 : i32, i32
  }
  func.func @transform_1(%arg0: i32) -> (i32, i32) {
    %c0_i32 = arith.constant 0 : i32
    %c0_i32_0 = arith.constant 0 : i32
    %c0_i32_1 = arith.constant 0 : i32
    return %c0_i32, %c0_i32_0 : i32, i32
  }
  func.func @transform_2(%arg0: i32) -> (i32, i32) {
    %c0_i32 = arith.constant 0 : i32
    %c0_i32_0 = arith.constant 0 : i32
    %c0_i32_1 = arith.constant 0 : i32
    return %c0_i32, %c0_i32_0 : i32, i32
  }
  func.func @transform_3(%arg0: i32) -> (i32, i32) {
    %c0_i32 = arith.constant 0 : i32
    %c0_i32_0 = arith.constant 0 : i32
    %c0_i32_1 = arith.constant 0 : i32
    return %c0_i32, %c0_i32_0 : i32, i32
  }
  func.func @transform_4(%arg0: i32) -> (i32, i32) {
    %c0_i32 = arith.constant 0 : i32
    %c0_i32_0 = arith.constant 0 : i32
    %c0_i32_1 = arith.constant 0 : i32
    return %c0_i32, %c0_i32_0 : i32, i32
  }
  func.func @transform_5(%arg0: i32) -> (i32, i32) {
    %c0_i32 = arith.constant 0 : i32
    %c0_i32_0 = arith.constant 0 : i32
    return %arg0, %c0_i32 : i32, i32
  }
}

</mosaic_0001>

<llo_original>
// kernel: tpu_custom_call.1
$region0: #{tpu_custom_call.1}
  #allocation0 [shape = 'u32[]', space=smem, size = 0x4, offset = 0x4, fixed_abs, tag = 'smem constant byte address 0x4 - core index']
  #allocation1 [shape = 'u32[144,128]{1,0:T(1,128)}', space=vmem, size = 0x12000, scoped, tag = 'internal scratch']
  %s0 = inlined_call_operand.hbm [shape: bf16[16,768], index: 0, kind: input, shape index: {}]
  %s1 = inlined_call_operand.hbm [shape: bf16[768,768], index: 1, kind: input, shape index: {}]
  %s2 = inlined_call_operand.hbm [shape: f32[1,768], index: 2, kind: input, shape index: {}]
  %s3 = inlined_call_operand.hbm [shape: bf16[768,128], index: 3, kind: input, shape index: {}]
  %s4 = inlined_call_operand.hbm [shape: f32[1,128], index: 4, kind: input, shape index: {}]
  %s5 = inlined_call_operand.hbm [shape: f32[16,128], index: 5, kind: output, shape index: {}]
  %s6 = sld [smem:[#allocation0]]
  $region50: #{tpu_custom_call.1} parent=0
    _
  %s8 = ssub.s32 1, %s6
  %s9 = scalar_select 0, %s8, %s6
  $region1: #{tpu_custom_call.1} parent=0
    #allocation2 [shape = 'u8[24576]{0}', space=vmem, size = 0x6000, scoped, tag = 'input window, operand 0, single buffered']
    #allocation3 [shape = 's32[1]{0}', space=sflag, size = 0x4, scoped, tag = 'scoped memory for tpu_custom_call.1']
    #allocation4 [shape = 's32[1]{0}', space=sflag, size = 0x4, scoped, tag = 'scoped memory for tpu_custom_call.1']
    #allocation5 [shape = 'u8[1179648]{0}', space=vmem, size = 0x120000, scoped, tag = 'input window, operand 1, single buffered']
    #allocation6 [shape = 's32[1]{0}', space=sflag, size = 0x4, scoped, tag = 'scoped memory for tpu_custom_call.1']
    #allocation7 [shape = 'u8[3072]{0}', space=vmem, size = 0xc00, scoped, tag = 'input window, operand 2, single buffered']
    #allocation8 [shape = 'u8[196608]{0}', space=vmem, size = 0x30000, scoped, tag = 'input window, operand 3, single buffered']
    #allocation9 [shape = 's32[1]{0}', space=sflag, size = 0x4, scoped, tag = 'scoped memory for tpu_custom_call.1']
    #allocation10 [shape = 'u8[512]{0}', space=vmem, size = 0x400, scoped, tag = 'input window, operand 4, single buffered']
    #allocation11 [shape = 'u8[8192]{0}', space=vmem, size = 0x2000, scoped, tag = 'output window, operand 0, single buffered']
    %10 = vsyncpa [#allocation3], 0
    %11 = vsyncpa [#allocation6], 0
    %12 = vsyncpa [#allocation9], 0
    %13 = vsyncpa [#allocation4], 0
    // Predicated region
    $region2: #{tpu_custom_call.1} parent=1 // pred_check
      _
    $region3: #{tpu_custom_call.1} parent=1 // pred_check_branch
      %15 = sbr.rel (0) target = $region5
    $region4: #{tpu_custom_call.1} parent=1 // pred_region
      %s17 = ssub.s32 768, 768
      %18 = vsyncadd [#allocation3], %s17
      %s19 = sshll.u32 [#allocation2], 4
      %s20 = int_to_ptr.vmem [resolvable:$true] %s19
      %25 = dma.hbm_to_vmem [thread:$0]  %s0, 768, %s20, [#allocation3], 384, 384, 24
    $region5: #{tpu_custom_call.1} parent=1 // pred_fallthru
      _
    // Predicated region
    $region6: #{tpu_custom_call.1} parent=1 // pred_check
      _
    $region7: #{tpu_custom_call.1} parent=1 // pred_check_branch
      %27 = sbr.rel (0) target = $region9
    $region8: #{tpu_custom_call.1} parent=1 // pred_region
      %s29 = ssub.s32 36864, 36864
      %30 = vsyncadd [#allocation6], %s29
      %s31 = sshll.u32 [#allocation5], 4
      %s32 = int_to_ptr.vmem [resolvable:$true] %s31
      %37 = dma.hbm_to_vmem [thread:$0]  %s1, 36864, %s32, [#allocation6], 384, 384, 24
    $region9: #{tpu_custom_call.1} parent=1 // pred_fallthru
      _
    // Predicated region
    $region10: #{tpu_custom_call.1} parent=1 // pred_check
      _
    $region11: #{tpu_custom_call.1} parent=1 // pred_check_branch
      %39 = sbr.rel (0) target = $region13
    $region12: #{tpu_custom_call.1} parent=1 // pred_region
      %s41 = ssub.s32 96, 96
      %42 = vsyncadd [#allocation6], %s41
      %s44 = sshll.u32 [#allocation7], 4
      %s45 = int_to_ptr.vmem [resolvable:$true] %s44
      %47 = dma.hbm_to_vmem [thread:$0]  %s2, 96, %s45, [#allocation6]
    $region13: #{tpu_custom_call.1} parent=1 // pred_fallthru
      _
    // Predicated region
    $region14: #{tpu_custom_call.1} parent=1 // pred_check
      _
    $region15: #{tpu_custom_call.1} parent=1 // pred_check_branch
      %49 = sbr.rel (0) target = $region17
    $region16: #{tpu_custom_call.1} parent=1 // pred_region
      %s51 = ssub.s32 6144, 6144
      %52 = vsyncadd [#allocation9], %s51
      %s53 = sshll.u32 [#allocation8], 4
      %s54 = int_to_ptr.vmem [resolvable:$true] %s53
      %59 = dma.hbm_to_vmem [thread:$0]  %s3, 6144, %s54, [#allocation9], 64, 64, 4
    $region17: #{tpu_custom_call.1} parent=1 // pred_fallthru
      _
    // Predicated region
    $region18: #{tpu_custom_call.1} parent=1 // pred_check
      _
    $region19: #{tpu_custom_call.1} parent=1 // pred_check_branch
      %61 = sbr.rel (0) target = $region21
    $region20: #{tpu_custom_call.1} parent=1 // pred_region
      %s63 = ssub.s32 16, 16
      %64 = vsyncadd [#allocation9], %s63
      %s66 = sshll.u32 [#allocation10], 4
      %s67 = int_to_ptr.vmem [resolvable:$true] %s66
      %69 = dma.hbm_to_vmem [thread:$0]  %s4, 16, %s67, [#allocation9]
    $region21: #{tpu_custom_call.1} parent=1 // pred_fallthru
      _
    // Predicated region
    $region22: #{tpu_custom_call.1} parent=1 // pred_check
      _
    $region23: #{tpu_custom_call.1} parent=1 // pred_check_branch
      %71 = sbr.rel (0) target = $region25
    $region24: #{tpu_custom_call.1} parent=1 // pred_region
      %72 = dma.done [#allocation3], 768
    $region25: #{tpu_custom_call.1} parent=1 // pred_fallthru
      _
    // Predicated region
    $region26: #{tpu_custom_call.1} parent=1 // pred_check
      _
    $region27: #{tpu_custom_call.1} parent=1 // pred_check_branch
      %74 = sbr.rel (0) target = $region29
    $region28: #{tpu_custom_call.1} parent=1 // pred_region
      %75 = dma.done [#allocation6], 36864
    $region29: #{tpu_custom_call.1} parent=1 // pred_fallthru
      _
    // Predicated region
    $region30: #{tpu_custom_call.1} parent=1 // pred_check
      _
    $region31: #{tpu_custom_call.1} parent=1 // pred_check_branch
      %77 = sbr.rel (0) target = $region33
    $region32: #{tpu_custom_call.1} parent=1 // pred_region
      %78 = dma.done [#allocation6], 96
    $region33: #{tpu_custom_call.1} parent=1 // pred_fallthru
      _
    // Predicated region
    $region34: #{tpu_custom_call.1} parent=1 // pred_check
      _
    $region35: #{tpu_custom_call.1} parent=1 // pred_check_branch
      %80 = sbr.rel (0) target = $region37
    $region36: #{tpu_custom_call.1} parent=1 // pred_region
      %81 = dma.done [#allocation9], 6144
    $region37: #{tpu_custom_call.1} parent=1 // pred_fallthru
      _
    // Predicated region
    $region38: #{tpu_custom_call.1} parent=1 // pred_check
      _
    $region39: #{tpu_custom_call.1} parent=1 // pred_check_branch
      %83 = sbr.rel (0) target = $region41
    $region40: #{tpu_custom_call.1} parent=1 // pred_region
      %84 = dma.done [#allocation9], 16
    $region41: #{tpu_custom_call.1} parent=1 // pred_fallthru
      _
    %v86 = vld [vmem:[#allocation2] sm:$0xff]
    %v87 = vld [vmem:[#allocation2 + $0x8] sm:$0xff]
    %v88 = vld [vmem:[#allocation2 + $0x10] sm:$0xff]
    %v89 = vld [vmem:[#allocation2 + $0x18] sm:$0xff]
    %v90 = vld [vmem:[#allocation2 + $0x20] sm:$0xff]
    %v91 = vld [vmem:[#allocation2 + $0x28] sm:$0xff]
    %v92 = vld [vmem:[#allocation5] sm:$0xff]
    %v93 = vld [vmem:[#allocation5 + $0x8] sm:$0xff]
    %v94 = vld [vmem:[#allocation5 + $0x10] sm:$0xff]
    %v95 = vld [vmem:[#allocation5 + $0x18] sm:$0xff]
    %v96 = vld [vmem:[#allocation5 + $0x20] sm:$0xff]
    %v97 = vld [vmem:[#allocation5 + $0x28] sm:$0xff]
    %v98 = vld [vmem:[#allocation5 + $0x30] sm:$0xff]
    %v99 = vld [vmem:[#allocation5 + $0x38] sm:$0xff]
    %v100 = vld [vmem:[#allocation5 + $0x40] sm:$0xff]
    %v101 = vld [vmem:[#allocation5 + $0x48] sm:$0xff]
    %v102 = vld [vmem:[#allocation5 + $0x50] sm:$0xff]
    %v103 = vld [vmem:[#allocation5 + $0x58] sm:$0xff]
    %v104 = vld [vmem:[#allocation5 + $0x60] sm:$0xff]
    %v105 = vld [vmem:[#allocation5 + $0x68] sm:$0xff]
    %v106 = vld [vmem:[#allocation5 + $0x70] sm:$0xff]
    %v107 = vld [vmem:[#allocation5 + $0x78] sm:$0xff]
    %v108 = vld [vmem:[#allocation5 + $0x80] sm:$0xff]
    %v109 = vld [vmem:[#allocation5 + $0x88] sm:$0xff]
    %v110 = vld [vmem:[#allocation5 + $0x90] sm:$0xff]
    %v111 = vld [vmem:[#allocation5 + $0x98] sm:$0xff]
    %v112 = vld [vmem:[#allocation5 + $0xa0] sm:$0xff]
    %v113 = vld [vmem:[#allocation5 + $0xa8] sm:$0xff]
    %v114 = vld [vmem:[#allocation5 + $0xb0] sm:$0xff]
    %v115 = vld [vmem:[#allocation5 + $0xb8] sm:$0xff]
    %v116 = vld [vmem:[#allocation5 + $0xc0] sm:$0xff]
    %v117 = vld [vmem:[#allocation5 + $0xc8] sm:$0xff]
    %v118 = vld [vmem:[#allocation5 + $0xd0] sm:$0xff]
    %v119 = vld [vmem:[#allocation5 + $0xd8] sm:$0xff]
    %v120 = vld [vmem:[#allocation5 + $0xe0] sm:$0xff]
    %v121 = vld [vmem:[#allocation5 + $0xe8] sm:$0xff]
    %v122 = vld [vmem:[#allocation5 + $0xf0] sm:$0xff]
    %v123 = vld [vmem:[#allocation5 + $0xf8] sm:$0xff]
    %v124 = vld [vmem:[#allocation5 + $0x100] sm:$0xff]
    %v125 = vld [vmem:[#allocation5 + $0x108] sm:$0xff]
    %v126 = vld [vmem:[#allocation5 + $0x110] sm:$0xff]
    %v127 = vld [vmem:[#allocation5 + $0x118] sm:$0xff]
    %v128 = vld [vmem:[#allocation5 + $0x120] sm:$0xff]
    %v129 = vld [vmem:[#allocation5 + $0x128] sm:$0xff]
    %v130 = vld [vmem:[#allocation5 + $0x130] sm:$0xff]
    %v131 = vld [vmem:[#allocation5 + $0x138] sm:$0xff]
    %v132 = vld [vmem:[#allocation5 + $0x140] sm:$0xff]
    %v133 = vld [vmem:[#allocation5 + $0x148] sm:$0xff]
    %v134 = vld [vmem:[#allocation5 + $0x150] sm:$0xff]
    %v135 = vld [vmem:[#allocation5 + $0x158] sm:$0xff]
    %v136 = vld [vmem:[#allocation5 + $0x160] sm:$0xff]
    %v137 = vld [vmem:[#allocation5 + $0x168] sm:$0xff]
    %v138 = vld [vmem:[#allocation5 + $0x170] sm:$0xff]
    %v139 = vld [vmem:[#allocation5 + $0x178] sm:$0xff]
    %v140 = vld [vmem:[#allocation5 + $0x180] sm:$0xff]
    %v141 = vld [vmem:[#allocation5 + $0x188] sm:$0xff]
    %v142 = vld [vmem:[#allocation5 + $0x190] sm:$0xff]
    %v143 = vld [vmem:[#allocation5 + $0x198] sm:$0xff]
    %v144 = vld [vmem:[#allocation5 + $0x1a0] sm:$0xff]
    %v145 = vld [vmem:[#allocation5 + $0x1a8] sm:$0xff]
    %v146 = vld [vmem:[#allocation5 + $0x1b0] sm:$0xff]
    %v147 = vld [vmem:[#allocation5 + $0x1b8] sm:$0xff]
    %v148 = vld [vmem:[#allocation5 + $0x1c0] sm:$0xff]
    %v149 = vld [vmem:[#allocation5 + $0x1c8] sm:$0xff]
    %v150 = vld [vmem:[#allocation5 + $0x1d0] sm:$0xff]
    %v151 = vld [vmem:[#allocation5 + $0x1d8] sm:$0xff]
    %v152 = vld [vmem:[#allocation5 + $0x1e0] sm:$0xff]
    %v153 = vld [vmem:[#allocation5 + $0x1e8] sm:$0xff]
    %v154 = vld [vmem:[#allocation5 + $0x1f0] sm:$0xff]
    %v155 = vld [vmem:[#allocation5 + $0x1f8] sm:$0xff]
    %v156 = vld [vmem:[#allocation5 + $0x200] sm:$0xff]
    %v157 = vld [vmem:[#allocation5 + $0x208] sm:$0xff]
    %v158 = vld [vmem:[#allocation5 + $0x210] sm:$0xff]
    %v159 = vld [vmem:[#allocation5 + $0x218] sm:$0xff]
    %v160 = vld [vmem:[#allocation5 + $0x220] sm:$0xff]
    %v161 = vld [vmem:[#allocation5 + $0x228] sm:$0xff]
    %v162 = vld [vmem:[#allocation5 + $0x230] sm:$0xff]
    %v163 = vld [vmem:[#allocation5 + $0x238] sm:$0xff]
    %v164 = vld [vmem:[#allocation5 + $0x240] sm:$0xff]
    %v165 = vld [vmem:[#allocation5 + $0x248] sm:$0xff]
    %v166 = vld [vmem:[#allocation5 + $0x250] sm:$0xff]
    %v167 = vld [vmem:[#allocation5 + $0x258] sm:$0xff]
    %v168 = vld [vmem:[#allocation5 + $0x260] sm:$0xff]
    %v169 = vld [vmem:[#allocation5 + $0x268] sm:$0xff]
    %v170 = vld [vmem:[#allocation5 + $0x270] sm:$0xff]
    %v171 = vld [vmem:[#allocation5 + $0x278] sm:$0xff]
    %v172 = vld [vmem:[#allocation5 + $0x280] sm:$0xff]
    %v173 = vld [vmem:[#allocation5 + $0x288] sm:$0xff]
    %v174 = vld [vmem:[#allocation5 + $0x290] sm:$0xff]
    %v175 = vld [vmem:[#allocation5 + $0x298] sm:$0xff]
    %v176 = vld [vmem:[#allocation5 + $0x2a0] sm:$0xff]
    %v177 = vld [vmem:[#allocation5 + $0x2a8] sm:$0xff]
    %v178 = vld [vmem:[#allocation5 + $0x2b0] sm:$0xff]
    %v179 = vld [vmem:[#allocation5 + $0x2b8] sm:$0xff]
    %v180 = vld [vmem:[#allocation5 + $0x2c0] sm:$0xff]
    %v181 = vld [vmem:[#allocation5 + $0x2c8] sm:$0xff]
    %v182 = vld [vmem:[#allocation5 + $0x2d0] sm:$0xff]
    %v183 = vld [vmem:[#allocation5 + $0x2d8] sm:$0xff]
    %v184 = vld [vmem:[#allocation5 + $0x2e0] sm:$0xff]
    %v185 = vld [vmem:[#allocation5 + $0x2e8] sm:$0xff]
    %v186 = vld [vmem:[#allocation5 + $0x2f0] sm:$0xff]
    %v187 = vld [vmem:[#allocation5 + $0x2f8] sm:$0xff]
    %v188 = vld [vmem:[#allocation5 + $0x300] sm:$0xff]
    %v189 = vld [vmem:[#allocation5 + $0x308] sm:$0xff]
    %v190 = vld [vmem:[#allocation5 + $0x310] sm:$0xff]
    %v191 = vld [vmem:[#allocation5 + $0x318] sm:$0xff]
    %v192 = vld [vmem:[#allocation5 + $0x320] sm:$0xff]
    %v193 = vld [vmem:[#allocation5 + $0x328] sm:$0xff]
    %v194 = vld [vmem:[#allocation5 + $0x330] sm:$0xff]
    %v195 = vld [vmem:[#allocation5 + $0x338] sm:$0xff]
    %v196 = vld [vmem:[#allocation5 + $0x340] sm:$0xff]
    %v197 = vld [vmem:[#allocation5 + $0x348] sm:$0xff]
    %v198 = vld [vmem:[#allocation5 + $0x350] sm:$0xff]
    %v199 = vld [vmem:[#allocation5 + $0x358] sm:$0xff]
    %v200 = vld [vmem:[#allocation5 + $0x360] sm:$0xff]
    %v201 = vld [vmem:[#allocation5 + $0x368] sm:$0xff]
    %v202 = vld [vmem:[#allocation5 + $0x370] sm:$0xff]
    %v203 = vld [vmem:[#allocation5 + $0x378] sm:$0xff]
    %v204 = vld [vmem:[#allocation5 + $0x380] sm:$0xff]
    %v205 = vld [vmem:[#allocation5 + $0x388] sm:$0xff]
    %v206 = vld [vmem:[#allocation5 + $0x390] sm:$0xff]
    %v207 = vld [vmem:[#allocation5 + $0x398] sm:$0xff]
    %v208 = vld [vmem:[#allocation5 + $0x3a0] sm:$0xff]
    %v209 = vld [vmem:[#allocation5 + $0x3a8] sm:$0xff]
    %v210 = vld [vmem:[#allocation5 + $0x3b0] sm:$0xff]
    %v211 = vld [vmem:[#allocation5 + $0x3b8] sm:$0xff]
    %v212 = vld [vmem:[#allocation5 + $0x3c0] sm:$0xff]
    %v213 = vld [vmem:[#allocation5 + $0x3c8] sm:$0xff]
    %v214 = vld [vmem:[#allocation5 + $0x3d0] sm:$0xff]
    %v215 = vld [vmem:[#allocation5 + $0x3d8] sm:$0xff]
    %v216 = vld [vmem:[#allocation5 + $0x3e0] sm:$0xff]
    %v217 = vld [vmem:[#allocation5 + $0x3e8] sm:$0xff]
    %v218 = vld [vmem:[#allocation5 + $0x3f0] sm:$0xff]
    %v219 = vld [vmem:[#allocation5 + $0x3f8] sm:$0xff]
    %v220 = vld [vmem:[#allocation5 + $0x400] sm:$0xff]
    %v221 = vld [vmem:[#allocation5 + $0x408] sm:$0xff]
    %v222 = vld [vmem:[#allocation5 + $0x410] sm:$0xff]
    %v223 = vld [vmem:[#allocation5 + $0x418] sm:$0xff]
    %v224 = vld [vmem:[#allocation5 + $0x420] sm:$0xff]
    %v225 = vld [vmem:[#allocation5 + $0x428] sm:$0xff]
    %v226 = vld [vmem:[#allocation5 + $0x430] sm:$0xff]
    %v227 = vld [vmem:[#allocation5 + $0x438] sm:$0xff]
    %v228 = vld [vmem:[#allocation5 + $0x440] sm:$0xff]
    %v229 = vld [vmem:[#allocation5 + $0x448] sm:$0xff]
    %v230 = vld [vmem:[#allocation5 + $0x450] sm:$0xff]
    %v231 = vld [vmem:[#allocation5 + $0x458] sm:$0xff]
    %v232 = vld [vmem:[#allocation5 + $0x460] sm:$0xff]
    %v233 = vld [vmem:[#allocation5 + $0x468] sm:$0xff]
    %v234 = vld [vmem:[#allocation5 + $0x470] sm:$0xff]
    %v235 = vld [vmem:[#allocation5 + $0x478] sm:$0xff]
    %v236 = vld [vmem:[#allocation5 + $0x480] sm:$0xff]
    %v237 = vld [vmem:[#allocation5 + $0x488] sm:$0xff]
    %v238 = vld [vmem:[#allocation5 + $0x490] sm:$0xff]
    %v239 = vld [vmem:[#allocation5 + $0x498] sm:$0xff]
    %v240 = vld [vmem:[#allocation5 + $0x4a0] sm:$0xff]
    %v241 = vld [vmem:[#allocation5 + $0x4a8] sm:$0xff]
    %v242 = vld [vmem:[#allocation5 + $0x4b0] sm:$0xff]
    %v243 = vld [vmem:[#allocation5 + $0x4b8] sm:$0xff]
    %v244 = vld [vmem:[#allocation5 + $0x4c0] sm:$0xff]
    %v245 = vld [vmem:[#allocation5 + $0x4c8] sm:$0xff]
    %v246 = vld [vmem:[#allocation5 + $0x4d0] sm:$0xff]
    %v247 = vld [vmem:[#allocation5 + $0x4d8] sm:$0xff]
    %v248 = vld [vmem:[#allocation5 + $0x4e0] sm:$0xff]
    %v249 = vld [vmem:[#allocation5 + $0x4e8] sm:$0xff]
    %v250 = vld [vmem:[#allocation5 + $0x4f0] sm:$0xff]
    %v251 = vld [vmem:[#allocation5 + $0x4f8] sm:$0xff]
    %v252 = vld [vmem:[#allocation5 + $0x500] sm:$0xff]
    %v253 = vld [vmem:[#allocation5 + $0x508] sm:$0xff]
    %v254 = vld [vmem:[#allocation5 + $0x510] sm:$0xff]
    %v255 = vld [vmem:[#allocation5 + $0x518] sm:$0xff]
    %v256 = vld [vmem:[#allocation5 + $0x520] sm:$0xff]
    %v257 = vld [vmem:[#allocation5 + $0x528] sm:$0xff]
    %v258 = vld [vmem:[#allocation5 + $0x530] sm:$0xff]
    %v259 = vld [vmem:[#allocation5 + $0x538] sm:$0xff]
    %v260 = vld [vmem:[#allocation5 + $0x540] sm:$0xff]
    %v261 = vld [vmem:[#allocation5 + $0x548] sm:$0xff]
    %v262 = vld [vmem:[#allocation5 + $0x550] sm:$0xff]
    %v263 = vld [vmem:[#allocation5 + $0x558] sm:$0xff]
    %v264 = vld [vmem:[#allocation5 + $0x560] sm:$0xff]
    %v265 = vld [vmem:[#allocation5 + $0x568] sm:$0xff]
    %v266 = vld [vmem:[#allocation5 + $0x570] sm:$0xff]
    %v267 = vld [vmem:[#allocation5 + $0x578] sm:$0xff]
    %v268 = vld [vmem:[#allocation5 + $0x580] sm:$0xff]
    %v269 = vld [vmem:[#allocation5 + $0x588] sm:$0xff]
    %v270 = vld [vmem:[#allocation5 + $0x590] sm:$0xff]
    %v271 = vld [vmem:[#allocation5 + $0x598] sm:$0xff]
    %v272 = vld [vmem:[#allocation5 + $0x5a0] sm:$0xff]
    %v273 = vld [vmem:[#allocation5 + $0x5a8] sm:$0xff]
    %v274 = vld [vmem:[#allocation5 + $0x5b0] sm:$0xff]
    %v275 = vld [vmem:[#allocation5 + $0x5b8] sm:$0xff]
    %v276 = vld [vmem:[#allocation5 + $0x5c0] sm:$0xff]
    %v277 = vld [vmem:[#allocation5 + $0x5c8] sm:$0xff]
    %v278 = vld [vmem:[#allocation5 + $0x5d0] sm:$0xff]
    %v279 = vld [vmem:[#allocation5 + $0x5d8] sm:$0xff]
    %v280 = vld [vmem:[#allocation5 + $0x5e0] sm:$0xff]
    %v281 = vld [vmem:[#allocation5 + $0x5e8] sm:$0xff]
    %v282 = vld [vmem:[#allocation5 + $0x5f0] sm:$0xff]
    %v283 = vld [vmem:[#allocation5 + $0x5f8] sm:$0xff]
    %v284 = vld [vmem:[#allocation5 + $0x600] sm:$0xff]
    %v285 = vld [vmem:[#allocation5 + $0x608] sm:$0xff]
    %v286 = vld [vmem:[#allocation5 + $0x610] sm:$0xff]
    %v287 = vld [vmem:[#allocation5 + $0x618] sm:$0xff]
    %v288 = vld [vmem:[#allocation5 + $0x620] sm:$0xff]
    %v289 = vld [vmem:[#allocation5 + $0x628] sm:$0xff]
    %v290 = vld [vmem:[#allocation5 + $0x630] sm:$0xff]
    %v291 = vld [vmem:[#allocation5 + $0x638] sm:$0xff]
    %v292 = vld [vmem:[#allocation5 + $0x640] sm:$0xff]
    %v293 = vld [vmem:[#allocation5 + $0x648] sm:$0xff]
    %v294 = vld [vmem:[#allocation5 + $0x650] sm:$0xff]
    %v295 = vld [vmem:[#allocation5 + $0x658] sm:$0xff]
    %v296 = vld [vmem:[#allocation5 + $0x660] sm:$0xff]
    %v297 = vld [vmem:[#allocation5 + $0x668] sm:$0xff]
    %v298 = vld [vmem:[#allocation5 + $0x670] sm:$0xff]
    %v299 = vld [vmem:[#allocation5 + $0x678] sm:$0xff]
    %v300 = vld [vmem:[#allocation5 + $0x680] sm:$0xff]
    %v301 = vld [vmem:[#allocation5 + $0x688] sm:$0xff]
    %v302 = vld [vmem:[#allocation5 + $0x690] sm:$0xff]
    %v303 = vld [vmem:[#allocation5 + $0x698] sm:$0xff]
    %v304 = vld [vmem:[#allocation5 + $0x6a0] sm:$0xff]
    %v305 = vld [vmem:[#allocation5 + $0x6a8] sm:$0xff]
    %v306 = vld [vmem:[#allocation5 + $0x6b0] sm:$0xff]
    %v307 = vld [vmem:[#allocation5 + $0x6b8] sm:$0xff]
    %v308 = vld [vmem:[#allocation5 + $0x6c0] sm:$0xff]
    %v309 = vld [vmem:[#allocation5 + $0x6c8] sm:$0xff]
    %v310 = vld [vmem:[#allocation5 + $0x6d0] sm:$0xff]
    %v311 = vld [vmem:[#allocation5 + $0x6d8] sm:$0xff]
    %v312 = vld [vmem:[#allocation5 + $0x6e0] sm:$0xff]
    %v313 = vld [vmem:[#allocation5 + $0x6e8] sm:$0xff]
    %v314 = vld [vmem:[#allocation5 + $0x6f0] sm:$0xff]
    %v315 = vld [vmem:[#allocation5 + $0x6f8] sm:$0xff]
    %v316 = vld [vmem:[#allocation5 + $0x700] sm:$0xff]
    %v317 = vld [vmem:[#allocation5 + $0x708] sm:$0xff]
    %v318 = vld [vmem:[#allocation5 + $0x710] sm:$0xff]
    %v319 = vld [vmem:[#allocation5 + $0x718] sm:$0xff]
    %v320 = vld [vmem:[#allocation5 + $0x720] sm:$0xff]
    %v321 = vld [vmem:[#allocation5 + $0x728] sm:$0xff]
    %v322 = vld [vmem:[#allocation5 + $0x730] sm:$0xff]
    %v323 = vld [vmem:[#allocation5 + $0x738] sm:$0xff]
    %v324 = vld [vmem:[#allocation5 + $0x740] sm:$0xff]
    %v325 = vld [vmem:[#allocation5 + $0x748] sm:$0xff]
    %v326 = vld [vmem:[#allocation5 + $0x750] sm:$0xff]
    %v327 = vld [vmem:[#allocation5 + $0x758] sm:$0xff]
    %v328 = vld [vmem:[#allocation5 + $0x760] sm:$0xff]
    %v329 = vld [vmem:[#allocation5 + $0x768] sm:$0xff]
    %v330 = vld [vmem:[#allocation5 + $0x770] sm:$0xff]
    %v331 = vld [vmem:[#allocation5 + $0x778] sm:$0xff]
    %v332 = vld [vmem:[#allocation5 + $0x780] sm:$0xff]
    %v333 = vld [vmem:[#allocation5 + $0x788] sm:$0xff]
    %v334 = vld [vmem:[#allocation5 + $0x790] sm:$0xff]
    %v335 = vld [vmem:[#allocation5 + $0x798] sm:$0xff]
    %v336 = vld [vmem:[#allocation5 + $0x7a0] sm:$0xff]
    %v337 = vld [vmem:[#allocation5 + $0x7a8] sm:$0xff]
    %v338 = vld [vmem:[#allocation5 + $0x7b0] sm:$0xff]
    %v339 = vld [vmem:[#allocation5 + $0x7b8] sm:$0xff]
    %v340 = vld [vmem:[#allocation5 + $0x7c0] sm:$0xff]
    %v341 = vld [vmem:[#allocation5 + $0x7c8] sm:$0xff]
    %v342 = vld [vmem:[#allocation5 + $0x7d0] sm:$0xff]
    %v343 = vld [vmem:[#allocation5 + $0x7d8] sm:$0xff]
    %v344 = vld [vmem:[#allocation5 + $0x7e0] sm:$0xff]
    %v345 = vld [vmem:[#allocation5 + $0x7e8] sm:$0xff]
    %v346 = vld [vmem:[#allocation5 + $0x7f0] sm:$0xff]
    %v347 = vld [vmem:[#allocation5 + $0x7f8] sm:$0xff]
    %v348 = vld [vmem:[#allocation5 + $0x800] sm:$0xff]
    %v349 = vld [vmem:[#allocation5 + $0x808] sm:$0xff]
    %v350 = vld [vmem:[#allocation5 + $0x810] sm:$0xff]
    %v351 = vld [vmem:[#allocation5 + $0x818] sm:$0xff]
    %v352 = vld [vmem:[#allocation5 + $0x820] sm:$0xff]
    %v353 = vld [vmem:[#allocation5 + $0x828] sm:$0xff]
    %v354 = vld [vmem:[#allocation5 + $0x830] sm:$0xff]
    %v355 = vld [vmem:[#allocation5 + $0x838] sm:$0xff]
    %v356 = vld [vmem:[#allocation5 + $0x840] sm:$0xff]
    %v357 = vld [vmem:[#allocation5 + $0x848] sm:$0xff]
    %v358 = vld [vmem:[#allocation5 + $0x850] sm:$0xff]
    %v359 = vld [vmem:[#allocation5 + $0x858] sm:$0xff]
    %v360 = vld [vmem:[#allocation5 + $0x860] sm:$0xff]
    %v361 = vld [vmem:[#allocation5 + $0x868] sm:$0xff]
    %v362 = vld [vmem:[#allocation5 + $0x870] sm:$0xff]
    %v363 = vld [vmem:[#allocation5 + $0x878] sm:$0xff]
    %v364 = vld [vmem:[#allocation5 + $0x880] sm:$0xff]
    %v365 = vld [vmem:[#allocation5 + $0x888] sm:$0xff]
    %v366 = vld [vmem:[#allocation5 + $0x890] sm:$0xff]
    %v367 = vld [vmem:[#allocation5 + $0x898] sm:$0xff]
    %v368 = vld [vmem:[#allocation5 + $0x8a0] sm:$0xff]
    %v369 = vld [vmem:[#allocation5 + $0x8a8] sm:$0xff]
    %v370 = vld [vmem:[#allocation5 + $0x8b0] sm:$0xff]
    %v371 = vld [vmem:[#allocation5 + $0x8b8] sm:$0xff]
    %v372 = vld [vmem:[#allocation5 + $0x8c0] sm:$0xff]
    %v373 = vld [vmem:[#allocation5 + $0x8c8] sm:$0xff]
    %v374 = vld [vmem:[#allocation5 + $0x8d0] sm:$0xff]
    %v375 = vld [vmem:[#allocation5 + $0x8d8] sm:$0xff]
    %v376 = vld [vmem:[#allocation5 + $0x8e0] sm:$0xff]
    %v377 = vld [vmem:[#allocation5 + $0x8e8] sm:$0xff]
    %v378 = vld [vmem:[#allocation5 + $0x8f0] sm:$0xff]
    %v379 = vld [vmem:[#allocation5 + $0x8f8] sm:$0xff]
    %v380 = vld [vmem:[#allocation7] sm:$0x3f]
    %v382 = vlaneseq
    %v383 = vshrl.u32 %v382, 7
    %v384 = vsub.s32 0, %v383
    %v385 = vrot.slane %v380, %v384
    %v386 = vlaneseq
    %v387 = vshrl.u32 %v386, 7
    %v388 = vsub.s32 1, %v387
    %v389 = vrot.slane %v380, %v388
    %v390 = vlaneseq
    %v391 = vshrl.u32 %v390, 7
    %v392 = vsub.s32 2, %v391
    %v393 = vrot.slane %v380, %v392
    %v394 = vlaneseq
    %v395 = vshrl.u32 %v394, 7
    %v396 = vsub.s32 3, %v395
    %v397 = vrot.slane %v380, %v396
    %v398 = vlaneseq
    %v399 = vshrl.u32 %v398, 7
    %v400 = vsub.s32 4, %v399
    %v401 = vrot.slane %v380, %v400
    %v402 = vlaneseq
    %v403 = vshrl.u32 %v402, 7
    %v404 = vsub.s32 5, %v403
    %v405 = vrot.slane %v380, %v404
    %v418 = vunpack.c.l.b16 %v86
    %v419 = vunpack.c.h.b16 %v86
    %v420 = vunpack.c.l.b16 %v87
    %v421 = vunpack.c.h.b16 %v87
    %v422 = vunpack.c.l.b16 %v88
    %v423 = vunpack.c.h.b16 %v88
    %v424 = vunpack.c.l.b16 %v89
    %v425 = vunpack.c.h.b16 %v89
    %v426 = vunpack.c.l.b16 %v90
    %v427 = vunpack.c.h.b16 %v90
    %v428 = vunpack.c.l.b16 %v91
    %v429 = vunpack.c.h.b16 %v91
    %v430 = vpack.c.b16 %v424, %v418
    %v431 = vpack.c.b16 %v425, %v419
    %v432 = vpack.c.b16 %v426, %v420
    %v433 = vpack.c.b16 %v427, %v421
    %v434 = vpack.c.b16 %v428, %v422
    %v435 = vpack.c.b16 %v429, %v423
    %v730 = vunpack.c.l.b16 %v92
    %v731 = vunpack.c.h.b16 %v92
    %v732 = vunpack.c.l.b16 %v93
    %v733 = vunpack.c.h.b16 %v93
    %v734 = vunpack.c.l.b16 %v94
    %v735 = vunpack.c.h.b16 %v94
    %v736 = vunpack.c.l.b16 %v95
    %v737 = vunpack.c.h.b16 %v95
    %v738 = vunpack.c.l.b16 %v96
    %v739 = vunpack.c.h.b16 %v96
    %v740 = vunpack.c.l.b16 %v97
    %v741 = vunpack.c.h.b16 %v97
    %v742 = vunpack.c.l.b16 %v98
    %v743 = vunpack.c.h.b16 %v98
    %v744 = vunpack.c.l.b16 %v99
    %v745 = vunpack.c.h.b16 %v99
    %v746 = vunpack.c.l.b16 %v100
    %v747 = vunpack.c.h.b16 %v100
    %v748 = vunpack.c.l.b16 %v101
    %v749 = vunpack.c.h.b16 %v101
    %v750 = vunpack.c.l.b16 %v102
    %v751 = vunpack.c.h.b16 %v102
    %v752 = vunpack.c.l.b16 %v103
    %v753 = vunpack.c.h.b16 %v103
    %v754 = vunpack.c.l.b16 %v104
    %v755 = vunpack.c.h.b16 %v104
    %v756 = vunpack.c.l.b16 %v105
    %v757 = vunpack.c.h.b16 %v105
    %v758 = vunpack.c.l.b16 %v106
    %v759 = vunpack.c.h.b16 %v106
    %v760 = vunpack.c.l.b16 %v107
    %v761 = vunpack.c.h.b16 %v107
    %v762 = vunpack.c.l.b16 %v108
    %v763 = vunpack.c.h.b16 %v108
    %v764 = vunpack.c.l.b16 %v109
    %v765 = vunpack.c.h.b16 %v109
    %v766 = vunpack.c.l.b16 %v110
    %v767 = vunpack.c.h.b16 %v110
    %v768 = vunpack.c.l.b16 %v111
    %v769 = vunpack.c.h.b16 %v111
    %v770 = vunpack.c.l.b16 %v112
    %v771 = vunpack.c.h.b16 %v112
    %v772 = vunpack.c.l.b16 %v113
    %v773 = vunpack.c.h.b16 %v113
    %v774 = vunpack.c.l.b16 %v114
    %v775 = vunpack.c.h.b16 %v114
    %v776 = vunpack.c.l.b16 %v115
    %v777 = vunpack.c.h.b16 %v115
    %v778 = vunpack.c.l.b16 %v116
    %v779 = vunpack.c.h.b16 %v116
    %v780 = vunpack.c.l.b16 %v117
    %v781 = vunpack.c.h.b16 %v117
    %v782 = vunpack.c.l.b16 %v118
    %v783 = vunpack.c.h.b16 %v118
    %v784 = vunpack.c.l.b16 %v119
    %v785 = vunpack.c.h.b16 %v119
    %v786 = vunpack.c.l.b16 %v120
    %v787 = vunpack.c.h.b16 %v120
    %v788 = vunpack.c.l.b16 %v121
    %v789 = vunpack.c.h.b16 %v121
    %v790 = vunpack.c.l.b16 %v122
    %v791 = vunpack.c.h.b16 %v122
    %v792 = vunpack.c.l.b16 %v123
    %v793 = vunpack.c.h.b16 %v123
    %v794 = vunpack.c.l.b16 %v124
    %v795 = vunpack.c.h.b16 %v124
    %v796 = vunpack.c.l.b16 %v125
    %v797 = vunpack.c.h.b16 %v125
    %v798 = vunpack.c.l.b16 %v126
    %v799 = vunpack.c.h.b16 %v126
    %v800 = vunpack.c.l.b16 %v127
    %v801 = vunpack.c.h.b16 %v127
    %v802 = vunpack.c.l.b16 %v128
    %v803 = vunpack.c.h.b16 %v128
    %v804 = vunpack.c.l.b16 %v129
    %v805 = vunpack.c.h.b16 %v129
    %v806 = vunpack.c.l.b16 %v130
    %v807 = vunpack.c.h.b16 %v130
    %v808 = vunpack.c.l.b16 %v131
    %v809 = vunpack.c.h.b16 %v131
    %v810 = vunpack.c.l.b16 %v132
    %v811 = vunpack.c.h.b16 %v132
    %v812 = vunpack.c.l.b16 %v133
    %v813 = vunpack.c.h.b16 %v133
    %v814 = vunpack.c.l.b16 %v134
    %v815 = vunpack.c.h.b16 %v134
    %v816 = vunpack.c.l.b16 %v135
    %v817 = vunpack.c.h.b16 %v135
    %v818 = vunpack.c.l.b16 %v136
    %v819 = vunpack.c.h.b16 %v136
    %v820 = vunpack.c.l.b16 %v137
    %v821 = vunpack.c.h.b16 %v137
    %v822 = vunpack.c.l.b16 %v138
    %v823 = vunpack.c.h.b16 %v138
    %v824 = vunpack.c.l.b16 %v139
    %v825 = vunpack.c.h.b16 %v139
    %v826 = vunpack.c.l.b16 %v140
    %v827 = vunpack.c.h.b16 %v140
    %v828 = vunpack.c.l.b16 %v141
    %v829 = vunpack.c.h.b16 %v141
    %v830 = vunpack.c.l.b16 %v142
    %v831 = vunpack.c.h.b16 %v142
    %v832 = vunpack.c.l.b16 %v143
    %v833 = vunpack.c.h.b16 %v143
    %v834 = vunpack.c.l.b16 %v144
    %v835 = vunpack.c.h.b16 %v144
    %v836 = vunpack.c.l.b16 %v145
    %v837 = vunpack.c.h.b16 %v145
    %v838 = vunpack.c.l.b16 %v146
    %v839 = vunpack.c.h.b16 %v146
    %v840 = vunpack.c.l.b16 %v147
    %v841 = vunpack.c.h.b16 %v147
    %v842 = vunpack.c.l.b16 %v148
    %v843 = vunpack.c.h.b16 %v148
    %v844 = vunpack.c.l.b16 %v149
    %v845 = vunpack.c.h.b16 %v149
    %v846 = vunpack.c.l.b16 %v150
    %v847 = vunpack.c.h.b16 %v150
    %v848 = vunpack.c.l.b16 %v151
    %v849 = vunpack.c.h.b16 %v151
    %v850 = vunpack.c.l.b16 %v152
    %v851 = vunpack.c.h.b16 %v152
    %v852 = vunpack.c.l.b16 %v153
    %v853 = vunpack.c.h.b16 %v153
    %v854 = vunpack.c.l.b16 %v154
    %v855 = vunpack.c.h.b16 %v154
    %v856 = vunpack.c.l.b16 %v155
    %v857 = vunpack.c.h.b16 %v155
    %v858 = vunpack.c.l.b16 %v156
    %v859 = vunpack.c.h.b16 %v156
    %v860 = vunpack.c.l.b16 %v157
    %v861 = vunpack.c.h.b16 %v157
    %v862 = vunpack.c.l.b16 %v158
    %v863 = vunpack.c.h.b16 %v158
    %v864 = vunpack.c.l.b16 %v159
    %v865 = vunpack.c.h.b16 %v159
    %v866 = vunpack.c.l.b16 %v160
    %v867 = vunpack.c.h.b16 %v160
    %v868 = vunpack.c.l.b16 %v161
    %v869 = vunpack.c.h.b16 %v161
    %v870 = vunpack.c.l.b16 %v162
    %v871 = vunpack.c.h.b16 %v162
    %v872 = vunpack.c.l.b16 %v163
    %v873 = vunpack.c.h.b16 %v163
    %v874 = vunpack.c.l.b16 %v164
    %v875 = vunpack.c.h.b16 %v164
    %v876 = vunpack.c.l.b16 %v165
    %v877 = vunpack.c.h.b16 %v165
    %v878 = vunpack.c.l.b16 %v166
    %v879 = vunpack.c.h.b16 %v166
    %v880 = vunpack.c.l.b16 %v167
    %v881 = vunpack.c.h.b16 %v167
    %v882 = vunpack.c.l.b16 %v168
    %v883 = vunpack.c.h.b16 %v168
    %v884 = vunpack.c.l.b16 %v169
    %v885 = vunpack.c.h.b16 %v169
    %v886 = vunpack.c.l.b16 %v170
    %v887 = vunpack.c.h.b16 %v170
    %v888 = vunpack.c.l.b16 %v171
    %v889 = vunpack.c.h.b16 %v171
    %v890 = vunpack.c.l.b16 %v172
    %v891 = vunpack.c.h.b16 %v172
    %v892 = vunpack.c.l.b16 %v173
    %v893 = vunpack.c.h.b16 %v173
    %v894 = vunpack.c.l.b16 %v174
    %v895 = vunpack.c.h.b16 %v174
    %v896 = vunpack.c.l.b16 %v175
    %v897 = vunpack.c.h.b16 %v175
    %v898 = vunpack.c.l.b16 %v176
    %v899 = vunpack.c.h.b16 %v176
    %v900 = vunpack.c.l.b16 %v177
    %v901 = vunpack.c.h.b16 %v177
    %v902 = vunpack.c.l.b16 %v178
    %v903 = vunpack.c.h.b16 %v178
    %v904 = vunpack.c.l.b16 %v179
    %v905 = vunpack.c.h.b16 %v179
    %v906 = vunpack.c.l.b16 %v180
    %v907 = vunpack.c.h.b16 %v180
    %v908 = vunpack.c.l.b16 %v181
    %v909 = vunpack.c.h.b16 %v181
    %v910 = vunpack.c.l.b16 %v182
    %v911 = vunpack.c.h.b16 %v182
    %v912 = vunpack.c.l.b16 %v183
    %v913 = vunpack.c.h.b16 %v183
    %v914 = vunpack.c.l.b16 %v184
    %v915 = vunpack.c.h.b16 %v184
    %v916 = vunpack.c.l.b16 %v185
    %v917 = vunpack.c.h.b16 %v185
    %v918 = vunpack.c.l.b16 %v186
    %v919 = vunpack.c.h.b16 %v186
    %v920 = vunpack.c.l.b16 %v187
    %v921 = vunpack.c.h.b16 %v187
    %v922 = vunpack.c.l.b16 %v188
    %v923 = vunpack.c.h.b16 %v188
    %v924 = vunpack.c.l.b16 %v189
    %v925 = vunpack.c.h.b16 %v189
    %v926 = vunpack.c.l.b16 %v190
    %v927 = vunpack.c.h.b16 %v190
    %v928 = vunpack.c.l.b16 %v191
    %v929 = vunpack.c.h.b16 %v191
    %v930 = vunpack.c.l.b16 %v192
    %v931 = vunpack.c.h.b16 %v192
    %v932 = vunpack.c.l.b16 %v193
    %v933 = vunpack.c.h.b16 %v193
    %v934 = vunpack.c.l.b16 %v194
    %v935 = vunpack.c.h.b16 %v194
    %v936 = vunpack.c.l.b16 %v195
    %v937 = vunpack.c.h.b16 %v195
    %v938 = vunpack.c.l.b16 %v196
    %v939 = vunpack.c.h.b16 %v196
    %v940 = vunpack.c.l.b16 %v197
    %v941 = vunpack.c.h.b16 %v197
    %v942 = vunpack.c.l.b16 %v198
    %v943 = vunpack.c.h.b16 %v198
    %v944 = vunpack.c.l.b16 %v199
    %v945 = vunpack.c.h.b16 %v199
    %v946 = vunpack.c.l.b16 %v200
    %v947 = vunpack.c.h.b16 %v200
    %v948 = vunpack.c.l.b16 %v201
    %v949 = vunpack.c.h.b16 %v201
    %v950 = vunpack.c.l.b16 %v202
    %v951 = vunpack.c.h.b16 %v202
    %v952 = vunpack.c.l.b16 %v203
    %v953 = vunpack.c.h.b16 %v203
    %v954 = vunpack.c.l.b16 %v204
    %v955 = vunpack.c.h.b16 %v204
    %v956 = vunpack.c.l.b16 %v205
    %v957 = vunpack.c.h.b16 %v205
    %v958 = vunpack.c.l.b16 %v206
    %v959 = vunpack.c.h.b16 %v206
    %v960 = vunpack.c.l.b16 %v207
    %v961 = vunpack.c.h.b16 %v207
    %v962 = vunpack.c.l.b16 %v208
    %v963 = vunpack.c.h.b16 %v208
    %v964 = vunpack.c.l.b16 %v209
    %v965 = vunpack.c.h.b16 %v209
    %v966 = vunpack.c.l.b16 %v210
    %v967 = vunpack.c.h.b16 %v210
    %v968 = vunpack.c.l.b16 %v211
    %v969 = vunpack.c.h.b16 %v211
    %v970 = vunpack.c.l.b16 %v212
    %v971 = vunpack.c.h.b16 %v212
    %v972 = vunpack.c.l.b16 %v213
    %v973 = vunpack.c.h.b16 %v213
    %v974 = vunpack.c.l.b16 %v214
    %v975 = vunpack.c.h.b16 %v214
    %v976 = vunpack.c.l.b16 %v215
    %v977 = vunpack.c.h.b16 %v215
    %v978 = vunpack.c.l.b16 %v216
    %v979 = vunpack.c.h.b16 %v216
    %v980 = vunpack.c.l.b16 %v217
    %v981 = vunpack.c.h.b16 %v217
    %v982 = vunpack.c.l.b16 %v218
    %v983 = vunpack.c.h.b16 %v218
    %v984 = vunpack.c.l.b16 %v219
    %v985 = vunpack.c.h.b16 %v219
    %v986 = vunpack.c.l.b16 %v220
    %v987 = vunpack.c.h.b16 %v220
    %v988 = vunpack.c.l.b16 %v221
    %v989 = vunpack.c.h.b16 %v221
    %v990 = vunpack.c.l.b16 %v222
    %v991 = vunpack.c.h.b16 %v222
    %v992 = vunpack.c.l.b16 %v223
    %v993 = vunpack.c.h.b16 %v223
    %v994 = vunpack.c.l.b16 %v224
    %v995 = vunpack.c.h.b16 %v224
    %v996 = vunpack.c.l.b16 %v225
    %v997 = vunpack.c.h.b16 %v225
    %v998 = vunpack.c.l.b16 %v226
    %v999 = vunpack.c.h.b16 %v226
    %v1000 = vunpack.c.l.b16 %v227
    %v1001 = vunpack.c.h.b16 %v227
    %v1002 = vunpack.c.l.b16 %v228
    %v1003 = vunpack.c.h.b16 %v228
    %v1004 = vunpack.c.l.b16 %v229
    %v1005 = vunpack.c.h.b16 %v229
    %v1006 = vunpack.c.l.b16 %v230
    %v1007 = vunpack.c.h.b16 %v230
    %v1008 = vunpack.c.l.b16 %v231
    %v1009 = vunpack.c.h.b16 %v231
    %v1010 = vunpack.c.l.b16 %v232
    %v1011 = vunpack.c.h.b16 %v232
    %v1012 = vunpack.c.l.b16 %v233
    %v1013 = vunpack.c.h.b16 %v233
    %v1014 = vunpack.c.l.b16 %v234
    %v1015 = vunpack.c.h.b16 %v234
    %v1016 = vunpack.c.l.b16 %v235
    %v1017 = vunpack.c.h.b16 %v235
    %v1018 = vunpack.c.l.b16 %v236
    %v1019 = vunpack.c.h.b16 %v236
    %v1020 = vunpack.c.l.b16 %v237
    %v1021 = vunpack.c.h.b16 %v237
    %v1022 = vunpack.c.l.b16 %v238
    %v1023 = vunpack.c.h.b16 %v238
    %v1024 = vunpack.c.l.b16 %v239
    %v1025 = vunpack.c.h.b16 %v239
    %v1026 = vunpack.c.l.b16 %v240
    %v1027 = vunpack.c.h.b16 %v240
    %v1028 = vunpack.c.l.b16 %v241
    %v1029 = vunpack.c.h.b16 %v241
    %v1030 = vunpack.c.l.b16 %v242
    %v1031 = vunpack.c.h.b16 %v242
    %v1032 = vunpack.c.l.b16 %v243
    %v1033 = vunpack.c.h.b16 %v243
    %v1034 = vunpack.c.l.b16 %v244
    %v1035 = vunpack.c.h.b16 %v244
    %v1036 = vunpack.c.l.b16 %v245
    %v1037 = vunpack.c.h.b16 %v245
    %v1038 = vunpack.c.l.b16 %v246
    %v1039 = vunpack.c.h.b16 %v246
    %v1040 = vunpack.c.l.b16 %v247
    %v1041 = vunpack.c.h.b16 %v247
    %v1042 = vunpack.c.l.b16 %v248
    %v1043 = vunpack.c.h.b16 %v248
    %v1044 = vunpack.c.l.b16 %v249
    %v1045 = vunpack.c.h.b16 %v249
    %v1046 = vunpack.c.l.b16 %v250
    %v1047 = vunpack.c.h.b16 %v250
    %v1048 = vunpack.c.l.b16 %v251
    %v1049 = vunpack.c.h.b16 %v251
    %v1050 = vunpack.c.l.b16 %v252
    %v1051 = vunpack.c.h.b16 %v252
    %v1052 = vunpack.c.l.b16 %v253
    %v1053 = vunpack.c.h.b16 %v253
    %v1054 = vunpack.c.l.b16 %v254
    %v1055 = vunpack.c.h.b16 %v254
    %v1056 = vunpack.c.l.b16 %v255
    %v1057 = vunpack.c.h.b16 %v255
    %v1058 = vunpack.c.l.b16 %v256
    %v1059 = vunpack.c.h.b16 %v256
    %v1060 = vunpack.c.l.b16 %v257
    %v1061 = vunpack.c.h.b16 %v257
    %v1062 = vunpack.c.l.b16 %v258
    %v1063 = vunpack.c.h.b16 %v258
    %v1064 = vunpack.c.l.b16 %v259
    %v1065 = vunpack.c.h.b16 %v259
    %v1066 = vunpack.c.l.b16 %v260
    %v1067 = vunpack.c.h.b16 %v260
    %v1068 = vunpack.c.l.b16 %v261
    %v1069 = vunpack.c.h.b16 %v261
    %v1070 = vunpack.c.l.b16 %v262
    %v1071 = vunpack.c.h.b16 %v262
    %v1072 = vunpack.c.l.b16 %v263
    %v1073 = vunpack.c.h.b16 %v263
    %v1074 = vunpack.c.l.b16 %v264
    %v1075 = vunpack.c.h.b16 %v264
    %v1076 = vunpack.c.l.b16 %v265
    %v1077 = vunpack.c.h.b16 %v265
    %v1078 = vunpack.c.l.b16 %v266
    %v1079 = vunpack.c.h.b16 %v266
    %v1080 = vunpack.c.l.b16 %v267
    %v1081 = vunpack.c.h.b16 %v267
    %v1082 = vunpack.c.l.b16 %v268
    %v1083 = vunpack.c.h.b16 %v268
    %v1084 = vunpack.c.l.b16 %v269
    %v1085 = vunpack.c.h.b16 %v269
    %v1086 = vunpack.c.l.b16 %v270
    %v1087 = vunpack.c.h.b16 %v270
    %v1088 = vunpack.c.l.b16 %v271
    %v1089 = vunpack.c.h.b16 %v271
    %v1090 = vunpack.c.l.b16 %v272
    %v1091 = vunpack.c.h.b16 %v272
    %v1092 = vunpack.c.l.b16 %v273
    %v1093 = vunpack.c.h.b16 %v273
    %v1094 = vunpack.c.l.b16 %v274
    %v1095 = vunpack.c.h.b16 %v274
    %v1096 = vunpack.c.l.b16 %v275
    %v1097 = vunpack.c.h.b16 %v275
    %v1098 = vunpack.c.l.b16 %v276
    %v1099 = vunpack.c.h.b16 %v276
    %v1100 = vunpack.c.l.b16 %v277
    %v1101 = vunpack.c.h.b16 %v277
    %v1102 = vunpack.c.l.b16 %v278
    %v1103 = vunpack.c.h.b16 %v278
    %v1104 = vunpack.c.l.b16 %v279
    %v1105 = vunpack.c.h.b16 %v279
    %v1106 = vunpack.c.l.b16 %v280
    %v1107 = vunpack.c.h.b16 %v280
    %v1108 = vunpack.c.l.b16 %v281
    %v1109 = vunpack.c.h.b16 %v281
    %v1110 = vunpack.c.l.b16 %v282
    %v1111 = vunpack.c.h.b16 %v282
    %v1112 = vunpack.c.l.b16 %v283
    %v1113 = vunpack.c.h.b16 %v283
    %v1114 = vunpack.c.l.b16 %v284
    %v1115 = vunpack.c.h.b16 %v284
    %v1116 = vunpack.c.l.b16 %v285
    %v1117 = vunpack.c.h.b16 %v285
    %v1118 = vunpack.c.l.b16 %v286
    %v1119 = vunpack.c.h.b16 %v286
    %v1120 = vunpack.c.l.b16 %v287
    %v1121 = vunpack.c.h.b16 %v287
    %v1122 = vunpack.c.l.b16 %v288
    %v1123 = vunpack.c.h.b16 %v288
    %v1124 = vunpack.c.l.b16 %v289
    %v1125 = vunpack.c.h.b16 %v289
    %v1126 = vunpack.c.l.b16 %v290
    %v1127 = vunpack.c.h.b16 %v290
    %v1128 = vunpack.c.l.b16 %v291
    %v1129 = vunpack.c.h.b16 %v291
    %v1130 = vunpack.c.l.b16 %v292
    %v1131 = vunpack.c.h.b16 %v292
    %v1132 = vunpack.c.l.b16 %v293
    %v1133 = vunpack.c.h.b16 %v293
    %v1134 = vunpack.c.l.b16 %v294
    %v1135 = vunpack.c.h.b16 %v294
    %v1136 = vunpack.c.l.b16 %v295
    %v1137 = vunpack.c.h.b16 %v295
    %v1138 = vunpack.c.l.b16 %v296
    %v1139 = vunpack.c.h.b16 %v296
    %v1140 = vunpack.c.l.b16 %v297
    %v1141 = vunpack.c.h.b16 %v297
    %v1142 = vunpack.c.l.b16 %v298
    %v1143 = vunpack.c.h.b16 %v298
    %v1144 = vunpack.c.l.b16 %v299
    %v1145 = vunpack.c.h.b16 %v299
    %v1146 = vunpack.c.l.b16 %v300
    %v1147 = vunpack.c.h.b16 %v300
    %v1148 = vunpack.c.l.b16 %v301
    %v1149 = vunpack.c.h.b16 %v301
    %v1150 = vunpack.c.l.b16 %v302
    %v1151 = vunpack.c.h.b16 %v302
    %v1152 = vunpack.c.l.b16 %v303
    %v1153 = vunpack.c.h.b16 %v303
    %v1154 = vunpack.c.l.b16 %v304
    %v1155 = vunpack.c.h.b16 %v304
    %v1156 = vunpack.c.l.b16 %v305
    %v1157 = vunpack.c.h.b16 %v305
    %v1158 = vunpack.c.l.b16 %v306
    %v1159 = vunpack.c.h.b16 %v306
    %v1160 = vunpack.c.l.b16 %v307
    %v1161 = vunpack.c.h.b16 %v307
    %v1162 = vunpack.c.l.b16 %v308
    %v1163 = vunpack.c.h.b16 %v308
    %v1164 = vunpack.c.l.b16 %v309
    %v1165 = vunpack.c.h.b16 %v309
    %v1166 = vunpack.c.l.b16 %v310
    %v1167 = vunpack.c.h.b16 %v310
    %v1168 = vunpack.c.l.b16 %v311
    %v1169 = vunpack.c.h.b16 %v311
    %v1170 = vunpack.c.l.b16 %v312
    %v1171 = vunpack.c.h.b16 %v312
    %v1172 = vunpack.c.l.b16 %v313
    %v1173 = vunpack.c.h.b16 %v313
    %v1174 = vunpack.c.l.b16 %v314
    %v1175 = vunpack.c.h.b16 %v314
    %v1176 = vunpack.c.l.b16 %v315
    %v1177 = vunpack.c.h.b16 %v315
    %v1178 = vunpack.c.l.b16 %v316
    %v1179 = vunpack.c.h.b16 %v316
    %v1180 = vunpack.c.l.b16 %v317
    %v1181 = vunpack.c.h.b16 %v317
    %v1182 = vunpack.c.l.b16 %v318
    %v1183 = vunpack.c.h.b16 %v318
    %v1184 = vunpack.c.l.b16 %v319
    %v1185 = vunpack.c.h.b16 %v319
    %v1186 = vunpack.c.l.b16 %v320
    %v1187 = vunpack.c.h.b16 %v320
    %v1188 = vunpack.c.l.b16 %v321
    %v1189 = vunpack.c.h.b16 %v321
    %v1190 = vunpack.c.l.b16 %v322
    %v1191 = vunpack.c.h.b16 %v322
    %v1192 = vunpack.c.l.b16 %v323
    %v1193 = vunpack.c.h.b16 %v323
    %v1194 = vunpack.c.l.b16 %v324
    %v1195 = vunpack.c.h.b16 %v324
    %v1196 = vunpack.c.l.b16 %v325
    %v1197 = vunpack.c.h.b16 %v325
    %v1198 = vunpack.c.l.b16 %v326
    %v1199 = vunpack.c.h.b16 %v326
    %v1200 = vunpack.c.l.b16 %v327
    %v1201 = vunpack.c.h.b16 %v327
    %v1202 = vunpack.c.l.b16 %v328
    %v1203 = vunpack.c.h.b16 %v328
    %v1204 = vunpack.c.l.b16 %v329
    %v1205 = vunpack.c.h.b16 %v329
    %v1206 = vunpack.c.l.b16 %v330
    %v1207 = vunpack.c.h.b16 %v330
    %v1208 = vunpack.c.l.b16 %v331
    %v1209 = vunpack.c.h.b16 %v331
    %v1210 = vunpack.c.l.b16 %v332
    %v1211 = vunpack.c.h.b16 %v332
    %v1212 = vunpack.c.l.b16 %v333
    %v1213 = vunpack.c.h.b16 %v333
    %v1214 = vunpack.c.l.b16 %v334
    %v1215 = vunpack.c.h.b16 %v334
    %v1216 = vunpack.c.l.b16 %v335
    %v1217 = vunpack.c.h.b16 %v335
    %v1218 = vunpack.c.l.b16 %v336
    %v1219 = vunpack.c.h.b16 %v336
    %v1220 = vunpack.c.l.b16 %v337
    %v1221 = vunpack.c.h.b16 %v337
    %v1222 = vunpack.c.l.b16 %v338
    %v1223 = vunpack.c.h.b16 %v338
    %v1224 = vunpack.c.l.b16 %v339
    %v1225 = vunpack.c.h.b16 %v339
    %v1226 = vunpack.c.l.b16 %v340
    %v1227 = vunpack.c.h.b16 %v340
    %v1228 = vunpack.c.l.b16 %v341
    %v1229 = vunpack.c.h.b16 %v341
    %v1230 = vunpack.c.l.b16 %v342
    %v1231 = vunpack.c.h.b16 %v342
    %v1232 = vunpack.c.l.b16 %v343
    %v1233 = vunpack.c.h.b16 %v343
    %v1234 = vunpack.c.l.b16 %v344
    %v1235 = vunpack.c.h.b16 %v344
    %v1236 = vunpack.c.l.b16 %v345
    %v1237 = vunpack.c.h.b16 %v345
    %v1238 = vunpack.c.l.b16 %v346
    %v1239 = vunpack.c.h.b16 %v346
    %v1240 = vunpack.c.l.b16 %v347
    %v1241 = vunpack.c.h.b16 %v347
    %v1242 = vunpack.c.l.b16 %v348
    %v1243 = vunpack.c.h.b16 %v348
    %v1244 = vunpack.c.l.b16 %v349
    %v1245 = vunpack.c.h.b16 %v349
    %v1246 = vunpack.c.l.b16 %v350
    %v1247 = vunpack.c.h.b16 %v350
    %v1248 = vunpack.c.l.b16 %v351
    %v1249 = vunpack.c.h.b16 %v351
    %v1250 = vunpack.c.l.b16 %v352
    %v1251 = vunpack.c.h.b16 %v352
    %v1252 = vunpack.c.l.b16 %v353
    %v1253 = vunpack.c.h.b16 %v353
    %v1254 = vunpack.c.l.b16 %v354
    %v1255 = vunpack.c.h.b16 %v354
    %v1256 = vunpack.c.l.b16 %v355
    %v1257 = vunpack.c.h.b16 %v355
    %v1258 = vunpack.c.l.b16 %v356
    %v1259 = vunpack.c.h.b16 %v356
    %v1260 = vunpack.c.l.b16 %v357
    %v1261 = vunpack.c.h.b16 %v357
    %v1262 = vunpack.c.l.b16 %v358
    %v1263 = vunpack.c.h.b16 %v358
    %v1264 = vunpack.c.l.b16 %v359
    %v1265 = vunpack.c.h.b16 %v359
    %v1266 = vunpack.c.l.b16 %v360
    %v1267 = vunpack.c.h.b16 %v360
    %v1268 = vunpack.c.l.b16 %v361
    %v1269 = vunpack.c.h.b16 %v361
    %v1270 = vunpack.c.l.b16 %v362
    %v1271 = vunpack.c.h.b16 %v362
    %v1272 = vunpack.c.l.b16 %v363
    %v1273 = vunpack.c.h.b16 %v363
    %v1274 = vunpack.c.l.b16 %v364
    %v1275 = vunpack.c.h.b16 %v364
    %v1276 = vunpack.c.l.b16 %v365
    %v1277 = vunpack.c.h.b16 %v365
    %v1278 = vunpack.c.l.b16 %v366
    %v1279 = vunpack.c.h.b16 %v366
    %v1280 = vunpack.c.l.b16 %v367
    %v1281 = vunpack.c.h.b16 %v367
    %v1282 = vunpack.c.l.b16 %v368
    %v1283 = vunpack.c.h.b16 %v368
    %v1284 = vunpack.c.l.b16 %v369
    %v1285 = vunpack.c.h.b16 %v369
    %v1286 = vunpack.c.l.b16 %v370
    %v1287 = vunpack.c.h.b16 %v370
    %v1288 = vunpack.c.l.b16 %v371
    %v1289 = vunpack.c.h.b16 %v371
    %v1290 = vunpack.c.l.b16 %v372
    %v1291 = vunpack.c.h.b16 %v372
    %v1292 = vunpack.c.l.b16 %v373
    %v1293 = vunpack.c.h.b16 %v373
    %v1294 = vunpack.c.l.b16 %v374
    %v1295 = vunpack.c.h.b16 %v374
    %v1296 = vunpack.c.l.b16 %v375
    %v1297 = vunpack.c.h.b16 %v375
    %v1298 = vunpack.c.l.b16 %v376
    %v1299 = vunpack.c.h.b16 %v376
    %v1300 = vunpack.c.l.b16 %v377
    %v1301 = vunpack.c.h.b16 %v377
    %v1302 = vunpack.c.l.b16 %v378
    %v1303 = vunpack.c.h.b16 %v378
    %v1304 = vunpack.c.l.b16 %v379
    %v1305 = vunpack.c.h.b16 %v379
    %v1306 = vpack.c.b16 %v736, %v730
    %v1307 = vpack.c.b16 %v737, %v731
    %v1308 = vpack.c.b16 %v738, %v732
    %v1309 = vpack.c.b16 %v739, %v733
    %v1310 = vpack.c.b16 %v740, %v734
    %v1311 = vpack.c.b16 %v741, %v735
    %v1312 = vpack.c.b16 %v748, %v742
    %v1313 = vpack.c.b16 %v749, %v743
    %v1314 = vpack.c.b16 %v750, %v744
    %v1315 = vpack.c.b16 %v751, %v745
    %v1316 = vpack.c.b16 %v752, %v746
    %v1317 = vpack.c.b16 %v753, %v747
    %v1318 = vpack.c.b16 %v760, %v754
    %v1319 = vpack.c.b16 %v761, %v755
    %v1320 = vpack.c.b16 %v762, %v756
    %v1321 = vpack.c.b16 %v763, %v757
    %v1322 = vpack.c.b16 %v764, %v758
    %v1323 = vpack.c.b16 %v765, %v759
    %v1324 = vpack.c.b16 %v772, %v766
    %v1325 = vpack.c.b16 %v773, %v767
    %v1326 = vpack.c.b16 %v774, %v768
    %v1327 = vpack.c.b16 %v775, %v769
    %v1328 = vpack.c.b16 %v776, %v770
    %v1329 = vpack.c.b16 %v777, %v771
    %v1330 = vpack.c.b16 %v784, %v778
    %v1331 = vpack.c.b16 %v785, %v779
    %v1332 = vpack.c.b16 %v786, %v780
    %v1333 = vpack.c.b16 %v787, %v781
    %v1334 = vpack.c.b16 %v788, %v782
    %v1335 = vpack.c.b16 %v789, %v783
    %v1336 = vpack.c.b16 %v796, %v790
    %v1337 = vpack.c.b16 %v797, %v791
    %v1338 = vpack.c.b16 %v798, %v792
    %v1339 = vpack.c.b16 %v799, %v793
    %v1340 = vpack.c.b16 %v800, %v794
    %v1341 = vpack.c.b16 %v801, %v795
    %v1342 = vpack.c.b16 %v808, %v802
    %v1343 = vpack.c.b16 %v809, %v803
    %v1344 = vpack.c.b16 %v810, %v804
    %v1345 = vpack.c.b16 %v811, %v805
    %v1346 = vpack.c.b16 %v812, %v806
    %v1347 = vpack.c.b16 %v813, %v807
    %v1348 = vpack.c.b16 %v820, %v814
    %v1349 = vpack.c.b16 %v821, %v815
    %v1350 = vpack.c.b16 %v822, %v816
    %v1351 = vpack.c.b16 %v823, %v817
    %v1352 = vpack.c.b16 %v824, %v818
    %v1353 = vpack.c.b16 %v825, %v819
    %v1354 = vpack.c.b16 %v832, %v826
    %v1355 = vpack.c.b16 %v833, %v827
    %v1356 = vpack.c.b16 %v834, %v828
    %v1357 = vpack.c.b16 %v835, %v829
    %v1358 = vpack.c.b16 %v836, %v830
    %v1359 = vpack.c.b16 %v837, %v831
    %v1360 = vpack.c.b16 %v844, %v838
    %v1361 = vpack.c.b16 %v845, %v839
    %v1362 = vpack.c.b16 %v846, %v840
    %v1363 = vpack.c.b16 %v847, %v841
    %v1364 = vpack.c.b16 %v848, %v842
    %v1365 = vpack.c.b16 %v849, %v843
    %v1366 = vpack.c.b16 %v856, %v850
    %v1367 = vpack.c.b16 %v857, %v851
    %v1368 = vpack.c.b16 %v858, %v852
    %v1369 = vpack.c.b16 %v859, %v853
    %v1370 = vpack.c.b16 %v860, %v854
    %v1371 = vpack.c.b16 %v861, %v855
    %v1372 = vpack.c.b16 %v868, %v862
    %v1373 = vpack.c.b16 %v869, %v863
    %v1374 = vpack.c.b16 %v870, %v864
    %v1375 = vpack.c.b16 %v871, %v865
    %v1376 = vpack.c.b16 %v872, %v866
    %v1377 = vpack.c.b16 %v873, %v867
    %v1378 = vpack.c.b16 %v880, %v874
    %v1379 = vpack.c.b16 %v881, %v875
    %v1380 = vpack.c.b16 %v882, %v876
    %v1381 = vpack.c.b16 %v883, %v877
    %v1382 = vpack.c.b16 %v884, %v878
    %v1383 = vpack.c.b16 %v885, %v879
    %v1384 = vpack.c.b16 %v892, %v886
    %v1385 = vpack.c.b16 %v893, %v887
    %v1386 = vpack.c.b16 %v894, %v888
    %v1387 = vpack.c.b16 %v895, %v889
    %v1388 = vpack.c.b16 %v896, %v890
    %v1389 = vpack.c.b16 %v897, %v891
    %v1390 = vpack.c.b16 %v904, %v898
    %v1391 = vpack.c.b16 %v905, %v899
    %v1392 = vpack.c.b16 %v906, %v900
    %v1393 = vpack.c.b16 %v907, %v901
    %v1394 = vpack.c.b16 %v908, %v902
    %v1395 = vpack.c.b16 %v909, %v903
    %v1396 = vpack.c.b16 %v916, %v910
    %v1397 = vpack.c.b16 %v917, %v911
    %v1398 = vpack.c.b16 %v918, %v912
    %v1399 = vpack.c.b16 %v919, %v913
    %v1400 = vpack.c.b16 %v920, %v914
    %v1401 = vpack.c.b16 %v921, %v915
    %v1402 = vpack.c.b16 %v928, %v922
    %v1403 = vpack.c.b16 %v929, %v923
    %v1404 = vpack.c.b16 %v930, %v924
    %v1405 = vpack.c.b16 %v931, %v925
    %v1406 = vpack.c.b16 %v932, %v926
    %v1407 = vpack.c.b16 %v933, %v927
    %v1408 = vpack.c.b16 %v940, %v934
    %v1409 = vpack.c.b16 %v941, %v935
    %v1410 = vpack.c.b16 %v942, %v936
    %v1411 = vpack.c.b16 %v943, %v937
    %v1412 = vpack.c.b16 %v944, %v938
    %v1413 = vpack.c.b16 %v945, %v939
    %v1414 = vpack.c.b16 %v952, %v946
    %v1415 = vpack.c.b16 %v953, %v947
    %v1416 = vpack.c.b16 %v954, %v948
    %v1417 = vpack.c.b16 %v955, %v949
    %v1418 = vpack.c.b16 %v956, %v950
    %v1419 = vpack.c.b16 %v957, %v951
    %v1420 = vpack.c.b16 %v964, %v958
    %v1421 = vpack.c.b16 %v965, %v959
    %v1422 = vpack.c.b16 %v966, %v960
    %v1423 = vpack.c.b16 %v967, %v961
    %v1424 = vpack.c.b16 %v968, %v962
    %v1425 = vpack.c.b16 %v969, %v963
    %v1426 = vpack.c.b16 %v976, %v970
    %v1427 = vpack.c.b16 %v977, %v971
    %v1428 = vpack.c.b16 %v978, %v972
    %v1429 = vpack.c.b16 %v979, %v973
    %v1430 = vpack.c.b16 %v980, %v974
    %v1431 = vpack.c.b16 %v981, %v975
    %v1432 = vpack.c.b16 %v988, %v982
    %v1433 = vpack.c.b16 %v989, %v983
    %v1434 = vpack.c.b16 %v990, %v984
    %v1435 = vpack.c.b16 %v991, %v985
    %v1436 = vpack.c.b16 %v992, %v986
    %v1437 = vpack.c.b16 %v993, %v987
    %v1438 = vpack.c.b16 %v1000, %v994
    %v1439 = vpack.c.b16 %v1001, %v995
    %v1440 = vpack.c.b16 %v1002, %v996
    %v1441 = vpack.c.b16 %v1003, %v997
    %v1442 = vpack.c.b16 %v1004, %v998
    %v1443 = vpack.c.b16 %v1005, %v999
    %v1444 = vpack.c.b16 %v1012, %v1006
    %v1445 = vpack.c.b16 %v1013, %v1007
    %v1446 = vpack.c.b16 %v1014, %v1008
    %v1447 = vpack.c.b16 %v1015, %v1009
    %v1448 = vpack.c.b16 %v1016, %v1010
    %v1449 = vpack.c.b16 %v1017, %v1011
    %v1450 = vpack.c.b16 %v1024, %v1018
    %v1451 = vpack.c.b16 %v1025, %v1019
    %v1452 = vpack.c.b16 %v1026, %v1020
    %v1453 = vpack.c.b16 %v1027, %v1021
    %v1454 = vpack.c.b16 %v1028, %v1022
    %v1455 = vpack.c.b16 %v1029, %v1023
    %v1456 = vpack.c.b16 %v1036, %v1030
    %v1457 = vpack.c.b16 %v1037, %v1031
    %v1458 = vpack.c.b16 %v1038, %v1032
    %v1459 = vpack.c.b16 %v1039, %v1033
    %v1460 = vpack.c.b16 %v1040, %v1034
    %v1461 = vpack.c.b16 %v1041, %v1035
    %v1462 = vpack.c.b16 %v1048, %v1042
    %v1463 = vpack.c.b16 %v1049, %v1043
    %v1464 = vpack.c.b16 %v1050, %v1044
    %v1465 = vpack.c.b16 %v1051, %v1045
    %v1466 = vpack.c.b16 %v1052, %v1046
    %v1467 = vpack.c.b16 %v1053, %v1047
    %v1468 = vpack.c.b16 %v1060, %v1054
    %v1469 = vpack.c.b16 %v1061, %v1055
    %v1470 = vpack.c.b16 %v1062, %v1056
    %v1471 = vpack.c.b16 %v1063, %v1057
    %v1472 = vpack.c.b16 %v1064, %v1058
    %v1473 = vpack.c.b16 %v1065, %v1059
    %v1474 = vpack.c.b16 %v1072, %v1066
    %v1475 = vpack.c.b16 %v1073, %v1067
    %v1476 = vpack.c.b16 %v1074, %v1068
    %v1477 = vpack.c.b16 %v1075, %v1069
    %v1478 = vpack.c.b16 %v1076, %v1070
    %v1479 = vpack.c.b16 %v1077, %v1071
    %v1480 = vpack.c.b16 %v1084, %v1078
    %v1481 = vpack.c.b16 %v1085, %v1079
    %v1482 = vpack.c.b16 %v1086, %v1080
    %v1483 = vpack.c.b16 %v1087, %v1081
    %v1484 = vpack.c.b16 %v1088, %v1082
    %v1485 = vpack.c.b16 %v1089, %v1083
    %v1486 = vpack.c.b16 %v1096, %v1090
    %v1487 = vpack.c.b16 %v1097, %v1091
    %v1488 = vpack.c.b16 %v1098, %v1092
    %v1489 = vpack.c.b16 %v1099, %v1093
    %v1490 = vpack.c.b16 %v1100, %v1094
    %v1491 = vpack.c.b16 %v1101, %v1095
    %v1492 = vpack.c.b16 %v1108, %v1102
    %v1493 = vpack.c.b16 %v1109, %v1103
    %v1494 = vpack.c.b16 %v1110, %v1104
    %v1495 = vpack.c.b16 %v1111, %v1105
    %v1496 = vpack.c.b16 %v1112, %v1106
    %v1497 = vpack.c.b16 %v1113, %v1107
    %v1498 = vpack.c.b16 %v1120, %v1114
    %v1499 = vpack.c.b16 %v1121, %v1115
    %v1500 = vpack.c.b16 %v1122, %v1116
    %v1501 = vpack.c.b16 %v1123, %v1117
    %v1502 = vpack.c.b16 %v1124, %v1118
    %v1503 = vpack.c.b16 %v1125, %v1119
    %v1504 = vpack.c.b16 %v1132, %v1126
    %v1505 = vpack.c.b16 %v1133, %v1127
    %v1506 = vpack.c.b16 %v1134, %v1128
    %v1507 = vpack.c.b16 %v1135, %v1129
    %v1508 = vpack.c.b16 %v1136, %v1130
    %v1509 = vpack.c.b16 %v1137, %v1131
    %v1510 = vpack.c.b16 %v1144, %v1138
    %v1511 = vpack.c.b16 %v1145, %v1139
    %v1512 = vpack.c.b16 %v1146, %v1140
    %v1513 = vpack.c.b16 %v1147, %v1141
    %v1514 = vpack.c.b16 %v1148, %v1142
    %v1515 = vpack.c.b16 %v1149, %v1143
    %v1516 = vpack.c.b16 %v1156, %v1150
    %v1517 = vpack.c.b16 %v1157, %v1151
    %v1518 = vpack.c.b16 %v1158, %v1152
    %v1519 = vpack.c.b16 %v1159, %v1153
    %v1520 = vpack.c.b16 %v1160, %v1154
    %v1521 = vpack.c.b16 %v1161, %v1155
    %v1522 = vpack.c.b16 %v1168, %v1162
    %v1523 = vpack.c.b16 %v1169, %v1163
    %v1524 = vpack.c.b16 %v1170, %v1164
    %v1525 = vpack.c.b16 %v1171, %v1165
    %v1526 = vpack.c.b16 %v1172, %v1166
    %v1527 = vpack.c.b16 %v1173, %v1167
    %v1528 = vpack.c.b16 %v1180, %v1174
    %v1529 = vpack.c.b16 %v1181, %v1175
    %v1530 = vpack.c.b16 %v1182, %v1176
    %v1531 = vpack.c.b16 %v1183, %v1177
    %v1532 = vpack.c.b16 %v1184, %v1178
    %v1533 = vpack.c.b16 %v1185, %v1179
    %v1534 = vpack.c.b16 %v1192, %v1186
    %v1535 = vpack.c.b16 %v1193, %v1187
    %v1536 = vpack.c.b16 %v1194, %v1188
    %v1537 = vpack.c.b16 %v1195, %v1189
    %v1538 = vpack.c.b16 %v1196, %v1190
    %v1539 = vpack.c.b16 %v1197, %v1191
    %v1540 = vpack.c.b16 %v1204, %v1198
    %v1541 = vpack.c.b16 %v1205, %v1199
    %v1542 = vpack.c.b16 %v1206, %v1200
    %v1543 = vpack.c.b16 %v1207, %v1201
    %v1544 = vpack.c.b16 %v1208, %v1202
    %v1545 = vpack.c.b16 %v1209, %v1203
    %v1546 = vpack.c.b16 %v1216, %v1210
    %v1547 = vpack.c.b16 %v1217, %v1211
    %v1548 = vpack.c.b16 %v1218, %v1212
    %v1549 = vpack.c.b16 %v1219, %v1213
    %v1550 = vpack.c.b16 %v1220, %v1214
    %v1551 = vpack.c.b16 %v1221, %v1215
    %v1552 = vpack.c.b16 %v1228, %v1222
    %v1553 = vpack.c.b16 %v1229, %v1223
    %v1554 = vpack.c.b16 %v1230, %v1224
    %v1555 = vpack.c.b16 %v1231, %v1225
    %v1556 = vpack.c.b16 %v1232, %v1226
    %v1557 = vpack.c.b16 %v1233, %v1227
    %v1558 = vpack.c.b16 %v1240, %v1234
    %v1559 = vpack.c.b16 %v1241, %v1235
    %v1560 = vpack.c.b16 %v1242, %v1236
    %v1561 = vpack.c.b16 %v1243, %v1237
    %v1562 = vpack.c.b16 %v1244, %v1238
    %v1563 = vpack.c.b16 %v1245, %v1239
    %v1564 = vpack.c.b16 %v1252, %v1246
    %v1565 = vpack.c.b16 %v1253, %v1247
    %v1566 = vpack.c.b16 %v1254, %v1248
    %v1567 = vpack.c.b16 %v1255, %v1249
    %v1568 = vpack.c.b16 %v1256, %v1250
    %v1569 = vpack.c.b16 %v1257, %v1251
    %v1570 = vpack.c.b16 %v1264, %v1258
    %v1571 = vpack.c.b16 %v1265, %v1259
    %v1572 = vpack.c.b16 %v1266, %v1260
    %v1573 = vpack.c.b16 %v1267, %v1261
    %v1574 = vpack.c.b16 %v1268, %v1262
    %v1575 = vpack.c.b16 %v1269, %v1263
    %v1576 = vpack.c.b16 %v1276, %v1270
    %v1577 = vpack.c.b16 %v1277, %v1271
    %v1578 = vpack.c.b16 %v1278, %v1272
    %v1579 = vpack.c.b16 %v1279, %v1273
    %v1580 = vpack.c.b16 %v1280, %v1274
    %v1581 = vpack.c.b16 %v1281, %v1275
    %v1582 = vpack.c.b16 %v1288, %v1282
    %v1583 = vpack.c.b16 %v1289, %v1283
    %v1584 = vpack.c.b16 %v1290, %v1284
    %v1585 = vpack.c.b16 %v1291, %v1285
    %v1586 = vpack.c.b16 %v1292, %v1286
    %v1587 = vpack.c.b16 %v1293, %v1287
    %v1588 = vpack.c.b16 %v1300, %v1294
    %v1589 = vpack.c.b16 %v1301, %v1295
    %v1590 = vpack.c.b16 %v1302, %v1296
    %v1591 = vpack.c.b16 %v1303, %v1297
    %v1592 = vpack.c.b16 %v1304, %v1298
    %v1593 = vpack.c.b16 %v1305, %v1299
    %1882 = vmatprep.subr.bf16.mxu0 %v1349
    %1883 = vmatpush1.bf16.msra.mxu0 %v1348
    %1884 = vmatprep.subr.bf16.mxu0 %v1343
    %1885 = vmatpush1.bf16.msra.mxu0 %v1342
    %1886 = vmatprep.subr.bf16.mxu0 %v1337
    %1887 = vmatpush1.bf16.msra.mxu0 %v1336
    %1888 = vmatprep.subr.bf16.mxu0 %v1331
    %1889 = vmatpush1.bf16.msra.mxu0 %v1330
    %1890 = vmatprep.subr.bf16.mxu0 %v1325
    %1891 = vmatpush1.bf16.msra.mxu0 %v1324
    %1892 = vmatprep.subr.bf16.mxu0 %v1319
    %1893 = vmatpush1.bf16.msra.mxu0 %v1318
    %1894 = vmatprep.subr.bf16.mxu0 %v1313
    %1895 = vmatpush1.bf16.msra.mxu0 %v1312
    %1896 = vmatprep.subr.bf16.mxu0 %v1307
    %1897 = vmatpush1.bf16.msra.mxu0 %v1306
    %1898 = vmatprep.subr.bf16.mxu0 %v1397
    %1899 = vmatpush2.bf16.msra.mxu0 %v1396
    %1900 = vmatprep.subr.bf16.mxu0 %v1391
    %1901 = vmatpush2.bf16.msra.mxu0 %v1390
    %1902 = vmatprep.subr.bf16.mxu0 %v1385
    %1903 = vmatpush2.bf16.msra.mxu0 %v1384
    %1904 = vmatprep.subr.bf16.mxu0 %v1379
    %1905 = vmatpush2.bf16.msra.mxu0 %v1378
    %1906 = vmatprep.subr.bf16.mxu0 %v1373
    %1907 = vmatpush2.bf16.msra.mxu0 %v1372
    %1908 = vmatprep.subr.bf16.mxu0 %v1367
    %1909 = vmatpush2.bf16.msra.mxu0 %v1366
    %1910 = vmatprep.subr.bf16.mxu0 %v1361
    %1911 = vmatpush2.bf16.msra.mxu0 %v1360
    %1912 = vmatprep.subr.bf16.mxu0 %v1355
    %1913 = vmatpush2.bf16.msra.mxu0 %v1354
    %1914 = vmatprep.mubr.bf16.mxu0 %v431
    %1915 = vmatmul.mubr.bf16.gmra.mxu0 %v430
    %v1916 = vpop.f32.mrf.mxu0
    %v1917 = vadd.f32 %v385, %v1916
    %v1918 = vpop.f32.mrf.mxu0
    %v1919 = vadd.f32 %v389, %v1918
    %v1920 = vpop.f32.mrf.mxu0
    %v1921 = vadd.f32 %v385, %v1920
    %v1922 = vpop.f32.mrf.mxu0
    %v1923 = vadd.f32 %v389, %v1922
    %1924 = vdwg.mxu0
    %1925 = vmatprep.subr.bf16.mxu0 %v1445
    %1926 = vmatpush1.bf16.msra.mxu0 %v1444
    %1927 = vmatprep.subr.bf16.mxu0 %v1439
    %1928 = vmatpush1.bf16.msra.mxu0 %v1438
    %1929 = vmatprep.subr.bf16.mxu0 %v1433
    %1930 = vmatpush1.bf16.msra.mxu0 %v1432
    %1931 = vmatprep.subr.bf16.mxu0 %v1427
    %1932 = vmatpush1.bf16.msra.mxu0 %v1426
    %1933 = vmatprep.subr.bf16.mxu0 %v1421
    %1934 = vmatpush1.bf16.msra.mxu0 %v1420
    %1935 = vmatprep.subr.bf16.mxu0 %v1415
    %1936 = vmatpush1.bf16.msra.mxu0 %v1414
    %1937 = vmatprep.subr.bf16.mxu0 %v1409
    %1938 = vmatpush1.bf16.msra.mxu0 %v1408
    %1939 = vmatprep.subr.bf16.mxu0 %v1403
    %1940 = vmatpush1.bf16.msra.mxu0 %v1402
    %1941 = vmatprep.subr.bf16.mxu0 %v1493
    %1942 = vmatpush2.bf16.msra.mxu0 %v1492
    %1943 = vmatprep.subr.bf16.mxu0 %v1487
    %1944 = vmatpush2.bf16.msra.mxu0 %v1486
    %1945 = vmatprep.subr.bf16.mxu0 %v1481
    %1946 = vmatpush2.bf16.msra.mxu0 %v1480
    %1947 = vmatprep.subr.bf16.mxu0 %v1475
    %1948 = vmatpush2.bf16.msra.mxu0 %v1474
    %1949 = vmatprep.subr.bf16.mxu0 %v1469
    %1950 = vmatpush2.bf16.msra.mxu0 %v1468
    %1951 = vmatprep.subr.bf16.mxu0 %v1463
    %1952 = vmatpush2.bf16.msra.mxu0 %v1462
    %1953 = vmatprep.subr.bf16.mxu0 %v1457
    %1954 = vmatpush2.bf16.msra.mxu0 %v1456
    %1955 = vmatprep.subr.bf16.mxu0 %v1451
    %1956 = vmatpush2.bf16.msra.mxu0 %v1450
    %1957 = vmatprep.mubr.bf16.mxu0 %v433
    %1958 = vmatmul.mubr.bf16.gmra.mxu0 %v432
    %v1959 = vpop.f32.mrf.mxu0
    %v1960 = vadd.f32 %v1917, %v1959
    %v1961 = vpop.f32.mrf.mxu0
    %v1962 = vadd.f32 %v1919, %v1961
    %v1963 = vpop.f32.mrf.mxu0
    %v1964 = vadd.f32 %v1921, %v1963
    %v1965 = vpop.f32.mrf.mxu0
    %v1966 = vadd.f32 %v1923, %v1965
    %1967 = vdwg.mxu0
    %1968 = vmatprep.subr.bf16.mxu0 %v1541
    %1969 = vmatpush1.bf16.msra.mxu0 %v1540
    %1970 = vmatprep.subr.bf16.mxu0 %v1535
    %1971 = vmatpush1.bf16.msra.mxu0 %v1534
    %1972 = vmatprep.subr.bf16.mxu0 %v1529
    %1973 = vmatpush1.bf16.msra.mxu0 %v1528
    %1974 = vmatprep.subr.bf16.mxu0 %v1523
    %1975 = vmatpush1.bf16.msra.mxu0 %v1522
    %1976 = vmatprep.subr.bf16.mxu0 %v1517
    %1977 = vmatpush1.bf16.msra.mxu0 %v1516
    %1978 = vmatprep.subr.bf16.mxu0 %v1511
    %1979 = vmatpush1.bf16.msra.mxu0 %v1510
    %1980 = vmatprep.subr.bf16.mxu0 %v1505
    %1981 = vmatpush1.bf16.msra.mxu0 %v1504
    %1982 = vmatprep.subr.bf16.mxu0 %v1499
    %1983 = vmatpush1.bf16.msra.mxu0 %v1498
    %1984 = vmatprep.subr.bf16.mxu0 %v1589
    %1985 = vmatpush2.bf16.msra.mxu0 %v1588
    %1986 = vmatprep.subr.bf16.mxu0 %v1583
    %1987 = vmatpush2.bf16.msra.mxu0 %v1582
    %1988 = vmatprep.subr.bf16.mxu0 %v1577
    %1989 = vmatpush2.bf16.msra.mxu0 %v1576
    %1990 = vmatprep.subr.bf16.mxu0 %v1571
    %1991 = vmatpush2.bf16.msra.mxu0 %v1570
    %1992 = vmatprep.subr.bf16.mxu0 %v1565
    %1993 = vmatpush2.bf16.msra.mxu0 %v1564
    %1994 = vmatprep.subr.bf16.mxu0 %v1559
    %1995 = vmatpush2.bf16.msra.mxu0 %v1558
    %1996 = vmatprep.subr.bf16.mxu0 %v1553
    %1997 = vmatpush2.bf16.msra.mxu0 %v1552
    %1998 = vmatprep.subr.bf16.mxu0 %v1547
    %1999 = vmatpush2.bf16.msra.mxu0 %v1546
    %2000 = vmatprep.mubr.bf16.mxu0 %v435
    %2001 = vmatmul.mubr.bf16.gmra.mxu0 %v434
    %v2002 = vpop.f32.mrf.mxu0
    %v2003 = vadd.f32 %v1960, %v2002
    %v2004 = vpop.f32.mrf.mxu0
    %v2005 = vadd.f32 %v1962, %v2004
    %v2006 = vpop.f32.mrf.mxu0
    %v2007 = vadd.f32 %v1964, %v2006
    %v2008 = vpop.f32.mrf.mxu0
    %v2009 = vadd.f32 %v1966, %v2008
    %2010 = vdwg.mxu0
    %2011 = vmatprep.subr.bf16.mxu0 %v1351
    %2012 = vmatpush1.bf16.msra.mxu0 %v1350
    %2013 = vmatprep.subr.bf16.mxu0 %v1345
    %2014 = vmatpush1.bf16.msra.mxu0 %v1344
    %2015 = vmatprep.subr.bf16.mxu0 %v1339
    %2016 = vmatpush1.bf16.msra.mxu0 %v1338
    %2017 = vmatprep.subr.bf16.mxu0 %v1333
    %2018 = vmatpush1.bf16.msra.mxu0 %v1332
    %2019 = vmatprep.subr.bf16.mxu0 %v1327
    %2020 = vmatpush1.bf16.msra.mxu0 %v1326
    %2021 = vmatprep.subr.bf16.mxu0 %v1321
    %2022 = vmatpush1.bf16.msra.mxu0 %v1320
    %2023 = vmatprep.subr.bf16.mxu0 %v1315
    %2024 = vmatpush1.bf16.msra.mxu0 %v1314
    %2025 = vmatprep.subr.bf16.mxu0 %v1309
    %2026 = vmatpush1.bf16.msra.mxu0 %v1308
    %2027 = vmatprep.subr.bf16.mxu0 %v1399
    %2028 = vmatpush2.bf16.msra.mxu0 %v1398
    %2029 = vmatprep.subr.bf16.mxu0 %v1393
    %2030 = vmatpush2.bf16.msra.mxu0 %v1392
    %2031 = vmatprep.subr.bf16.mxu0 %v1387
    %2032 = vmatpush2.bf16.msra.mxu0 %v1386
    %2033 = vmatprep.subr.bf16.mxu0 %v1381
    %2034 = vmatpush2.bf16.msra.mxu0 %v1380
    %2035 = vmatprep.subr.bf16.mxu0 %v1375
    %2036 = vmatpush2.bf16.msra.mxu0 %v1374
    %2037 = vmatprep.subr.bf16.mxu0 %v1369
    %2038 = vmatpush2.bf16.msra.mxu0 %v1368
    %2039 = vmatprep.subr.bf16.mxu0 %v1363
    %2040 = vmatpush2.bf16.msra.mxu0 %v1362
    %2041 = vmatprep.subr.bf16.mxu0 %v1357
    %2042 = vmatpush2.bf16.msra.mxu0 %v1356
    %2043 = vmatprep.mubr.bf16.mxu0 %v431
    %2044 = vmatmul.mubr.bf16.gmra.mxu0 %v430
    %v2045 = vpop.f32.mrf.mxu0
    %v2046 = vadd.f32 %v393, %v2045
    %v2047 = vpop.f32.mrf.mxu0
    %v2048 = vadd.f32 %v397, %v2047
    %v2049 = vpop.f32.mrf.mxu0
    %v2050 = vadd.f32 %v393, %v2049
    %v2051 = vpop.f32.mrf.mxu0
    %v2052 = vadd.f32 %v397, %v2051
    %2053 = vdwg.mxu0
    %2054 = vmatprep.subr.bf16.mxu0 %v1447
    %2055 = vmatpush1.bf16.msra.mxu0 %v1446
    %2056 = vmatprep.subr.bf16.mxu0 %v1441
    %2057 = vmatpush1.bf16.msra.mxu0 %v1440
    %2058 = vmatprep.subr.bf16.mxu0 %v1435
    %2059 = vmatpush1.bf16.msra.mxu0 %v1434
    %2060 = vmatprep.subr.bf16.mxu0 %v1429
    %2061 = vmatpush1.bf16.msra.mxu0 %v1428
    %2062 = vmatprep.subr.bf16.mxu0 %v1423
    %2063 = vmatpush1.bf16.msra.mxu0 %v1422
    %2064 = vmatprep.subr.bf16.mxu0 %v1417
    %2065 = vmatpush1.bf16.msra.mxu0 %v1416
    %2066 = vmatprep.subr.bf16.mxu0 %v1411
    %2067 = vmatpush1.bf16.msra.mxu0 %v1410
    %2068 = vmatprep.subr.bf16.mxu0 %v1405
    %2069 = vmatpush1.bf16.msra.mxu0 %v1404
    %2070 = vmatprep.subr.bf16.mxu0 %v1495
    %2071 = vmatpush2.bf16.msra.mxu0 %v1494
    %2072 = vmatprep.subr.bf16.mxu0 %v1489
    %2073 = vmatpush2.bf16.msra.mxu0 %v1488
    %2074 = vmatprep.subr.bf16.mxu0 %v1483
    %2075 = vmatpush2.bf16.msra.mxu0 %v1482
    %2076 = vmatprep.subr.bf16.mxu0 %v1477
    %2077 = vmatpush2.bf16.msra.mxu0 %v1476
    %2078 = vmatprep.subr.bf16.mxu0 %v1471
    %2079 = vmatpush2.bf16.msra.mxu0 %v1470
    %2080 = vmatprep.subr.bf16.mxu0 %v1465
    %2081 = vmatpush2.bf16.msra.mxu0 %v1464
    %2082 = vmatprep.subr.bf16.mxu0 %v1459
    %2083 = vmatpush2.bf16.msra.mxu0 %v1458
    %2084 = vmatprep.subr.bf16.mxu0 %v1453
    %2085 = vmatpush2.bf16.msra.mxu0 %v1452
    %2086 = vmatprep.mubr.bf16.mxu0 %v433
    %2087 = vmatmul.mubr.bf16.gmra.mxu0 %v432
    %v2088 = vpop.f32.mrf.mxu0
    %v2089 = vadd.f32 %v2046, %v2088
    %v2090 = vpop.f32.mrf.mxu0
    %v2091 = vadd.f32 %v2048, %v2090
    %v2092 = vpop.f32.mrf.mxu0
    %v2093 = vadd.f32 %v2050, %v2092
    %v2094 = vpop.f32.mrf.mxu0
    %v2095 = vadd.f32 %v2052, %v2094
    %2096 = vdwg.mxu0
    %2097 = vmatprep.subr.bf16.mxu0 %v1543
    %2098 = vmatpush1.bf16.msra.mxu0 %v1542
    %2099 = vmatprep.subr.bf16.mxu0 %v1537
    %2100 = vmatpush1.bf16.msra.mxu0 %v1536
    %2101 = vmatprep.subr.bf16.mxu0 %v1531
    %2102 = vmatpush1.bf16.msra.mxu0 %v1530
    %2103 = vmatprep.subr.bf16.mxu0 %v1525
    %2104 = vmatpush1.bf16.msra.mxu0 %v1524
    %2105 = vmatprep.subr.bf16.mxu0 %v1519
    %2106 = vmatpush1.bf16.msra.mxu0 %v1518
    %2107 = vmatprep.subr.bf16.mxu0 %v1513
    %2108 = vmatpush1.bf16.msra.mxu0 %v1512
    %2109 = vmatprep.subr.bf16.mxu0 %v1507
    %2110 = vmatpush1.bf16.msra.mxu0 %v1506
    %2111 = vmatprep.subr.bf16.mxu0 %v1501
    %2112 = vmatpush1.bf16.msra.mxu0 %v1500
    %2113 = vmatprep.subr.bf16.mxu0 %v1591
    %2114 = vmatpush2.bf16.msra.mxu0 %v1590
    %2115 = vmatprep.subr.bf16.mxu0 %v1585
    %2116 = vmatpush2.bf16.msra.mxu0 %v1584
    %2117 = vmatprep.subr.bf16.mxu0 %v1579
    %2118 = vmatpush2.bf16.msra.mxu0 %v1578
    %2119 = vmatprep.subr.bf16.mxu0 %v1573
    %2120 = vmatpush2.bf16.msra.mxu0 %v1572
    %2121 = vmatprep.subr.bf16.mxu0 %v1567
    %2122 = vmatpush2.bf16.msra.mxu0 %v1566
    %2123 = vmatprep.subr.bf16.mxu0 %v1561
    %2124 = vmatpush2.bf16.msra.mxu0 %v1560
    %2125 = vmatprep.subr.bf16.mxu0 %v1555
    %2126 = vmatpush2.bf16.msra.mxu0 %v1554
    %2127 = vmatprep.subr.bf16.mxu0 %v1549
    %2128 = vmatpush2.bf16.msra.mxu0 %v1548
    %2129 = vmatprep.mubr.bf16.mxu0 %v435
    %2130 = vmatmul.mubr.bf16.gmra.mxu0 %v434
    %v2131 = vpop.f32.mrf.mxu0
    %v2132 = vadd.f32 %v2089, %v2131
    %v2133 = vpop.f32.mrf.mxu0
    %v2134 = vadd.f32 %v2091, %v2133
    %v2135 = vpop.f32.mrf.mxu0
    %v2136 = vadd.f32 %v2093, %v2135
    %v2137 = vpop.f32.mrf.mxu0
    %v2138 = vadd.f32 %v2095, %v2137
    %2139 = vdwg.mxu0
    %2140 = vmatprep.subr.bf16.mxu0 %v1353
    %2141 = vmatpush1.bf16.msra.mxu0 %v1352
    %2142 = vmatprep.subr.bf16.mxu0 %v1347
    %2143 = vmatpush1.bf16.msra.mxu0 %v1346
    %2144 = vmatprep.subr.bf16.mxu0 %v1341
    %2145 = vmatpush1.bf16.msra.mxu0 %v1340
    %2146 = vmatprep.subr.bf16.mxu0 %v1335
    %2147 = vmatpush1.bf16.msra.mxu0 %v1334
    %2148 = vmatprep.subr.bf16.mxu0 %v1329
    %2149 = vmatpush1.bf16.msra.mxu0 %v1328
    %2150 = vmatprep.subr.bf16.mxu0 %v1323
    %2151 = vmatpush1.bf16.msra.mxu0 %v1322
    %2152 = vmatprep.subr.bf16.mxu0 %v1317
    %2153 = vmatpush1.bf16.msra.mxu0 %v1316
    %2154 = vmatprep.subr.bf16.mxu0 %v1311
    %2155 = vmatpush1.bf16.msra.mxu0 %v1310
    %2156 = vmatprep.subr.bf16.mxu0 %v1401
    %2157 = vmatpush2.bf16.msra.mxu0 %v1400
    %2158 = vmatprep.subr.bf16.mxu0 %v1395
    %2159 = vmatpush2.bf16.msra.mxu0 %v1394
    %2160 = vmatprep.subr.bf16.mxu0 %v1389
    %2161 = vmatpush2.bf16.msra.mxu0 %v1388
    %2162 = vmatprep.subr.bf16.mxu0 %v1383
    %2163 = vmatpush2.bf16.msra.mxu0 %v1382
    %2164 = vmatprep.subr.bf16.mxu0 %v1377
    %2165 = vmatpush2.bf16.msra.mxu0 %v1376
    %2166 = vmatprep.subr.bf16.mxu0 %v1371
    %2167 = vmatpush2.bf16.msra.mxu0 %v1370
    %2168 = vmatprep.subr.bf16.mxu0 %v1365
    %2169 = vmatpush2.bf16.msra.mxu0 %v1364
    %2170 = vmatprep.subr.bf16.mxu0 %v1359
    %2171 = vmatpush2.bf16.msra.mxu0 %v1358
    %2172 = vmatprep.mubr.bf16.mxu0 %v431
    %2173 = vmatmul.mubr.bf16.gmra.mxu0 %v430
    %v2174 = vpop.f32.mrf.mxu0
    %v2175 = vadd.f32 %v401, %v2174
    %v2176 = vpop.f32.mrf.mxu0
    %v2177 = vadd.f32 %v405, %v2176
    %v2178 = vpop.f32.mrf.mxu0
    %v2179 = vadd.f32 %v401, %v2178
    %v2180 = vpop.f32.mrf.mxu0
    %v2181 = vadd.f32 %v405, %v2180
    %2182 = vdwg.mxu0
    %2183 = vmatprep.subr.bf16.mxu0 %v1449
    %2184 = vmatpush1.bf16.msra.mxu0 %v1448
    %2185 = vmatprep.subr.bf16.mxu0 %v1443
    %2186 = vmatpush1.bf16.msra.mxu0 %v1442
    %2187 = vmatprep.subr.bf16.mxu0 %v1437
    %2188 = vmatpush1.bf16.msra.mxu0 %v1436
    %2189 = vmatprep.subr.bf16.mxu0 %v1431
    %2190 = vmatpush1.bf16.msra.mxu0 %v1430
    %2191 = vmatprep.subr.bf16.mxu0 %v1425
    %2192 = vmatpush1.bf16.msra.mxu0 %v1424
    %2193 = vmatprep.subr.bf16.mxu0 %v1419
    %2194 = vmatpush1.bf16.msra.mxu0 %v1418
    %2195 = vmatprep.subr.bf16.mxu0 %v1413
    %2196 = vmatpush1.bf16.msra.mxu0 %v1412
    %2197 = vmatprep.subr.bf16.mxu0 %v1407
    %2198 = vmatpush1.bf16.msra.mxu0 %v1406
    %2199 = vmatprep.subr.bf16.mxu0 %v1497
    %2200 = vmatpush2.bf16.msra.mxu0 %v1496
    %2201 = vmatprep.subr.bf16.mxu0 %v1491
    %2202 = vmatpush2.bf16.msra.mxu0 %v1490
    %2203 = vmatprep.subr.bf16.mxu0 %v1485
    %2204 = vmatpush2.bf16.msra.mxu0 %v1484
    %2205 = vmatprep.subr.bf16.mxu0 %v1479
    %2206 = vmatpush2.bf16.msra.mxu0 %v1478
    %2207 = vmatprep.subr.bf16.mxu0 %v1473
    %2208 = vmatpush2.bf16.msra.mxu0 %v1472
    %2209 = vmatprep.subr.bf16.mxu0 %v1467
    %2210 = vmatpush2.bf16.msra.mxu0 %v1466
    %2211 = vmatprep.subr.bf16.mxu0 %v1461
    %2212 = vmatpush2.bf16.msra.mxu0 %v1460
    %2213 = vmatprep.subr.bf16.mxu0 %v1455
    %2214 = vmatpush2.bf16.msra.mxu0 %v1454
    %2215 = vmatprep.mubr.bf16.mxu0 %v433
    %2216 = vmatmul.mubr.bf16.gmra.mxu0 %v432
    %v2217 = vpop.f32.mrf.mxu0
    %v2218 = vadd.f32 %v2175, %v2217
    %v2219 = vpop.f32.mrf.mxu0
    %v2220 = vadd.f32 %v2177, %v2219
    %v2221 = vpop.f32.mrf.mxu0
    %v2222 = vadd.f32 %v2179, %v2221
    %v2223 = vpop.f32.mrf.mxu0
    %v2224 = vadd.f32 %v2181, %v2223
    %2225 = vdwg.mxu0
    %2226 = vmatprep.subr.bf16.mxu0 %v1545
    %2227 = vmatpush1.bf16.msra.mxu0 %v1544
    %2228 = vmatprep.subr.bf16.mxu0 %v1539
    %2229 = vmatpush1.bf16.msra.mxu0 %v1538
    %2230 = vmatprep.subr.bf16.mxu0 %v1533
    %2231 = vmatpush1.bf16.msra.mxu0 %v1532
    %2232 = vmatprep.subr.bf16.mxu0 %v1527
    %2233 = vmatpush1.bf16.msra.mxu0 %v1526
    %2234 = vmatprep.subr.bf16.mxu0 %v1521
    %2235 = vmatpush1.bf16.msra.mxu0 %v1520
    %2236 = vmatprep.subr.bf16.mxu0 %v1515
    %2237 = vmatpush1.bf16.msra.mxu0 %v1514
    %2238 = vmatprep.subr.bf16.mxu0 %v1509
    %2239 = vmatpush1.bf16.msra.mxu0 %v1508
    %2240 = vmatprep.subr.bf16.mxu0 %v1503
    %2241 = vmatpush1.bf16.msra.mxu0 %v1502
    %2242 = vmatprep.subr.bf16.mxu0 %v1593
    %2243 = vmatpush2.bf16.msra.mxu0 %v1592
    %2244 = vmatprep.subr.bf16.mxu0 %v1587
    %2245 = vmatpush2.bf16.msra.mxu0 %v1586
    %2246 = vmatprep.subr.bf16.mxu0 %v1581
    %2247 = vmatpush2.bf16.msra.mxu0 %v1580
    %2248 = vmatprep.subr.bf16.mxu0 %v1575
    %2249 = vmatpush2.bf16.msra.mxu0 %v1574
    %2250 = vmatprep.subr.bf16.mxu0 %v1569
    %2251 = vmatpush2.bf16.msra.mxu0 %v1568
    %2252 = vmatprep.subr.bf16.mxu0 %v1563
    %2253 = vmatpush2.bf16.msra.mxu0 %v1562
    %2254 = vmatprep.subr.bf16.mxu0 %v1557
    %2255 = vmatpush2.bf16.msra.mxu0 %v1556
    %2256 = vmatprep.subr.bf16.mxu0 %v1551
    %2257 = vmatpush2.bf16.msra.mxu0 %v1550
    %2258 = vmatprep.mubr.bf16.mxu0 %v435
    %2259 = vmatmul.mubr.bf16.gmra.mxu0 %v434
    %v2260 = vpop.f32.mrf.mxu0
    %v2261 = vadd.f32 %v2218, %v2260
    %v2262 = vpop.f32.mrf.mxu0
    %v2263 = vadd.f32 %v2220, %v2262
    %v2264 = vpop.f32.mrf.mxu0
    %v2265 = vadd.f32 %v2222, %v2264
    %v2266 = vpop.f32.mrf.mxu0
    %v2267 = vadd.f32 %v2224, %v2266
    %2268 = vdwg.mxu0
    %v2269 = vtanh.pop %v2003
    %v2270 = vtanh.pop %v2005
    %v2271 = vtanh.pop %v2132
    %v2272 = vtanh.pop %v2134
    %v2273 = vtanh.pop %v2261
    %v2274 = vtanh.pop %v2263
    %v2275 = vtanh.pop %v2007
    %v2276 = vtanh.pop %v2009
    %v2277 = vtanh.pop %v2136
    %v2278 = vtanh.pop %v2138
    %v2279 = vtanh.pop %v2265
    %v2280 = vtanh.pop %v2267
    %v2281 = vpack.c.bf16 %v2275, %v2269
    %v2282 = vpack.c.bf16 %v2276, %v2270
    %v2283 = vpack.c.bf16 %v2277, %v2271
    %v2284 = vpack.c.bf16 %v2278, %v2272
    %v2285 = vpack.c.bf16 %v2279, %v2273
    %v2286 = vpack.c.bf16 %v2280, %v2274
    %v2287 = vld [vmem:[#allocation8] sm:$0xf]
    %v2288 = vld [vmem:[#allocation8 + $0x4] sm:$0xf]
    %v2289 = vld [vmem:[#allocation8 + $0x8] sm:$0xf]
    %v2290 = vld [vmem:[#allocation8 + $0xc] sm:$0xf]
    %v2291 = vld [vmem:[#allocation8 + $0x10] sm:$0xf]
    %v2292 = vld [vmem:[#allocation8 + $0x14] sm:$0xf]
    %v2293 = vld [vmem:[#allocation8 + $0x18] sm:$0xf]
    %v2294 = vld [vmem:[#allocation8 + $0x1c] sm:$0xf]
    %v2295 = vld [vmem:[#allocation8 + $0x20] sm:$0xf]
    %v2296 = vld [vmem:[#allocation8 + $0x24] sm:$0xf]
    %v2297 = vld [vmem:[#allocation8 + $0x28] sm:$0xf]
    %v2298 = vld [vmem:[#allocation8 + $0x2c] sm:$0xf]
    %v2299 = vld [vmem:[#allocation8 + $0x30] sm:$0xf]
    %v2300 = vld [vmem:[#allocation8 + $0x34] sm:$0xf]
    %v2301 = vld [vmem:[#allocation8 + $0x38] sm:$0xf]
    %v2302 = vld [vmem:[#allocation8 + $0x3c] sm:$0xf]
    %v2303 = vld [vmem:[#allocation8 + $0x40] sm:$0xf]
    %v2304 = vld [vmem:[#allocation8 + $0x44] sm:$0xf]
    %v2305 = vld [vmem:[#allocation8 + $0x48] sm:$0xf]
    %v2306 = vld [vmem:[#allocation8 + $0x4c] sm:$0xf]
    %v2307 = vld [vmem:[#allocation8 + $0x50] sm:$0xf]
    %v2308 = vld [vmem:[#allocation8 + $0x54] sm:$0xf]
    %v2309 = vld [vmem:[#allocation8 + $0x58] sm:$0xf]
    %v2310 = vld [vmem:[#allocation8 + $0x5c] sm:$0xf]
    %v2311 = vld [vmem:[#allocation8 + $0x60] sm:$0xf]
    %v2312 = vld [vmem:[#allocation8 + $0x64] sm:$0xf]
    %v2313 = vld [vmem:[#allocation8 + $0x68] sm:$0xf]
    %v2314 = vld [vmem:[#allocation8 + $0x6c] sm:$0xf]
    %v2315 = vld [vmem:[#allocation8 + $0x70] sm:$0xf]
    %v2316 = vld [vmem:[#allocation8 + $0x74] sm:$0xf]
    %v2317 = vld [vmem:[#allocation8 + $0x78] sm:$0xf]
    %v2318 = vld [vmem:[#allocation8 + $0x7c] sm:$0xf]
    %v2319 = vld [vmem:[#allocation8 + $0x80] sm:$0xf]
    %v2320 = vld [vmem:[#allocation8 + $0x84] sm:$0xf]
    %v2321 = vld [vmem:[#allocation8 + $0x88] sm:$0xf]
    %v2322 = vld [vmem:[#allocation8 + $0x8c] sm:$0xf]
    %v2323 = vld [vmem:[#allocation8 + $0x90] sm:$0xf]
    %v2324 = vld [vmem:[#allocation8 + $0x94] sm:$0xf]
    %v2325 = vld [vmem:[#allocation8 + $0x98] sm:$0xf]
    %v2326 = vld [vmem:[#allocation8 + $0x9c] sm:$0xf]
    %v2327 = vld [vmem:[#allocation8 + $0xa0] sm:$0xf]
    %v2328 = vld [vmem:[#allocation8 + $0xa4] sm:$0xf]
    %v2329 = vld [vmem:[#allocation8 + $0xa8] sm:$0xf]
    %v2330 = vld [vmem:[#allocation8 + $0xac] sm:$0xf]
    %v2331 = vld [vmem:[#allocation8 + $0xb0] sm:$0xf]
    %v2332 = vld [vmem:[#allocation8 + $0xb4] sm:$0xf]
    %v2333 = vld [vmem:[#allocation8 + $0xb8] sm:$0xf]
    %v2334 = vld [vmem:[#allocation8 + $0xbc] sm:$0xf]
    %v2335 = vld [vmem:[#allocation8 + $0xc0] sm:$0xf]
    %v2336 = vld [vmem:[#allocation8 + $0xc4] sm:$0xf]
    %v2337 = vld [vmem:[#allocation8 + $0xc8] sm:$0xf]
    %v2338 = vld [vmem:[#allocation8 + $0xcc] sm:$0xf]
    %v2339 = vld [vmem:[#allocation8 + $0xd0] sm:$0xf]
    %v2340 = vld [vmem:[#allocation8 + $0xd4] sm:$0xf]
    %v2341 = vld [vmem:[#allocation8 + $0xd8] sm:$0xf]
    %v2342 = vld [vmem:[#allocation8 + $0xdc] sm:$0xf]
    %v2343 = vld [vmem:[#allocation8 + $0xe0] sm:$0xf]
    %v2344 = vld [vmem:[#allocation8 + $0xe4] sm:$0xf]
    %v2345 = vld [vmem:[#allocation8 + $0xe8] sm:$0xf]
    %v2346 = vld [vmem:[#allocation8 + $0xec] sm:$0xf]
    %v2347 = vld [vmem:[#allocation8 + $0xf0] sm:$0xf]
    %v2348 = vld [vmem:[#allocation8 + $0xf4] sm:$0xf]
    %v2349 = vld [vmem:[#allocation8 + $0xf8] sm:$0xf]
    %v2350 = vld [vmem:[#allocation8 + $0xfc] sm:$0xf]
    %v2351 = vld [vmem:[#allocation8 + $0x100] sm:$0xf]
    %v2352 = vld [vmem:[#allocation8 + $0x104] sm:$0xf]
    %v2353 = vld [vmem:[#allocation8 + $0x108] sm:$0xf]
    %v2354 = vld [vmem:[#allocation8 + $0x10c] sm:$0xf]
    %v2355 = vld [vmem:[#allocation8 + $0x110] sm:$0xf]
    %v2356 = vld [vmem:[#allocation8 + $0x114] sm:$0xf]
    %v2357 = vld [vmem:[#allocation8 + $0x118] sm:$0xf]
    %v2358 = vld [vmem:[#allocation8 + $0x11c] sm:$0xf]
    %v2359 = vld [vmem:[#allocation8 + $0x120] sm:$0xf]
    %v2360 = vld [vmem:[#allocation8 + $0x124] sm:$0xf]
    %v2361 = vld [vmem:[#allocation8 + $0x128] sm:$0xf]
    %v2362 = vld [vmem:[#allocation8 + $0x12c] sm:$0xf]
    %v2363 = vld [vmem:[#allocation8 + $0x130] sm:$0xf]
    %v2364 = vld [vmem:[#allocation8 + $0x134] sm:$0xf]
    %v2365 = vld [vmem:[#allocation8 + $0x138] sm:$0xf]
    %v2366 = vld [vmem:[#allocation8 + $0x13c] sm:$0xf]
    %v2367 = vld [vmem:[#allocation8 + $0x140] sm:$0xf]
    %v2368 = vld [vmem:[#allocation8 + $0x144] sm:$0xf]
    %v2369 = vld [vmem:[#allocation8 + $0x148] sm:$0xf]
    %v2370 = vld [vmem:[#allocation8 + $0x14c] sm:$0xf]
    %v2371 = vld [vmem:[#allocation8 + $0x150] sm:$0xf]
    %v2372 = vld [vmem:[#allocation8 + $0x154] sm:$0xf]
    %v2373 = vld [vmem:[#allocation8 + $0x158] sm:$0xf]
    %v2374 = vld [vmem:[#allocation8 + $0x15c] sm:$0xf]
    %v2375 = vld [vmem:[#allocation8 + $0x160] sm:$0xf]
    %v2376 = vld [vmem:[#allocation8 + $0x164] sm:$0xf]
    %v2377 = vld [vmem:[#allocation8 + $0x168] sm:$0xf]
    %v2378 = vld [vmem:[#allocation8 + $0x16c] sm:$0xf]
    %v2379 = vld [vmem:[#allocation8 + $0x170] sm:$0xf]
    %v2380 = vld [vmem:[#allocation8 + $0x174] sm:$0xf]
    %v2381 = vld [vmem:[#allocation8 + $0x178] sm:$0xf]
    %v2382 = vld [vmem:[#allocation8 + $0x17c] sm:$0xf]
    %v2383 = vld [vmem:[#allocation10] sm:$0x1]
    %v2385 = vlaneseq
    %v2386 = vshrl.u32 %v2385, 7
    %v2387 = vsub.s32 0, %v2386
    %v2388 = vrot.slane %v2383, %v2387
    %v2486 = vunpack.c.l.b16 %v2287
    %v2487 = vunpack.c.l.b16 %v2288
    %v2488 = vunpack.c.l.b16 %v2289
    %v2489 = vunpack.c.l.b16 %v2290
    %v2490 = vunpack.c.l.b16 %v2291
    %v2491 = vunpack.c.l.b16 %v2292
    %v2492 = vunpack.c.l.b16 %v2293
    %v2493 = vunpack.c.l.b16 %v2294
    %v2494 = vunpack.c.l.b16 %v2295
    %v2495 = vunpack.c.l.b16 %v2296
    %v2496 = vunpack.c.l.b16 %v2297
    %v2497 = vunpack.c.l.b16 %v2298
    %v2498 = vunpack.c.l.b16 %v2299
    %v2499 = vunpack.c.l.b16 %v2300
    %v2500 = vunpack.c.l.b16 %v2301
    %v2501 = vunpack.c.l.b16 %v2302
    %v2502 = vunpack.c.l.b16 %v2303
    %v2503 = vunpack.c.l.b16 %v2304
    %v2504 = vunpack.c.l.b16 %v2305
    %v2505 = vunpack.c.l.b16 %v2306
    %v2506 = vunpack.c.l.b16 %v2307
    %v2507 = vunpack.c.l.b16 %v2308
    %v2508 = vunpack.c.l.b16 %v2309
    %v2509 = vunpack.c.l.b16 %v2310
    %v2510 = vunpack.c.l.b16 %v2311
    %v2511 = vunpack.c.l.b16 %v2312
    %v2512 = vunpack.c.l.b16 %v2313
    %v2513 = vunpack.c.l.b16 %v2314
    %v2514 = vunpack.c.l.b16 %v2315
    %v2515 = vunpack.c.l.b16 %v2316
    %v2516 = vunpack.c.l.b16 %v2317
    %v2517 = vunpack.c.l.b16 %v2318
    %v2518 = vunpack.c.l.b16 %v2319
    %v2519 = vunpack.c.l.b16 %v2320
    %v2520 = vunpack.c.l.b16 %v2321
    %v2521 = vunpack.c.l.b16 %v2322
    %v2522 = vunpack.c.l.b16 %v2323
    %v2523 = vunpack.c.l.b16 %v2324
    %v2524 = vunpack.c.l.b16 %v2325
    %v2525 = vunpack.c.l.b16 %v2326
    %v2526 = vunpack.c.l.b16 %v2327
    %v2527 = vunpack.c.l.b16 %v2328
    %v2528 = vunpack.c.l.b16 %v2329
    %v2529 = vunpack.c.l.b16 %v2330
    %v2530 = vunpack.c.l.b16 %v2331
    %v2531 = vunpack.c.l.b16 %v2332
    %v2532 = vunpack.c.l.b16 %v2333
    %v2533 = vunpack.c.l.b16 %v2334
    %v2534 = vunpack.c.l.b16 %v2335
    %v2535 = vunpack.c.l.b16 %v2336
    %v2536 = vunpack.c.l.b16 %v2337
    %v2537 = vunpack.c.l.b16 %v2338
    %v2538 = vunpack.c.l.b16 %v2339
    %v2539 = vunpack.c.l.b16 %v2340
    %v2540 = vunpack.c.l.b16 %v2341
    %v2541 = vunpack.c.l.b16 %v2342
    %v2542 = vunpack.c.l.b16 %v2343
    %v2543 = vunpack.c.l.b16 %v2344
    %v2544 = vunpack.c.l.b16 %v2345
    %v2545 = vunpack.c.l.b16 %v2346
    %v2546 = vunpack.c.l.b16 %v2347
    %v2547 = vunpack.c.l.b16 %v2348
    %v2548 = vunpack.c.l.b16 %v2349
    %v2549 = vunpack.c.l.b16 %v2350
    %v2550 = vunpack.c.l.b16 %v2351
    %v2551 = vunpack.c.l.b16 %v2352
    %v2552 = vunpack.c.l.b16 %v2353
    %v2553 = vunpack.c.l.b16 %v2354
    %v2554 = vunpack.c.l.b16 %v2355
    %v2555 = vunpack.c.l.b16 %v2356
    %v2556 = vunpack.c.l.b16 %v2357
    %v2557 = vunpack.c.l.b16 %v2358
    %v2558 = vunpack.c.l.b16 %v2359
    %v2559 = vunpack.c.l.b16 %v2360
    %v2560 = vunpack.c.l.b16 %v2361
    %v2561 = vunpack.c.l.b16 %v2362
    %v2562 = vunpack.c.l.b16 %v2363
    %v2563 = vunpack.c.l.b16 %v2364
    %v2564 = vunpack.c.l.b16 %v2365
    %v2565 = vunpack.c.l.b16 %v2366
    %v2566 = vunpack.c.l.b16 %v2367
    %v2567 = vunpack.c.l.b16 %v2368
    %v2568 = vunpack.c.l.b16 %v2369
    %v2569 = vunpack.c.l.b16 %v2370
    %v2570 = vunpack.c.l.b16 %v2371
    %v2571 = vunpack.c.l.b16 %v2372
    %v2572 = vunpack.c.l.b16 %v2373
    %v2573 = vunpack.c.l.b16 %v2374
    %v2574 = vunpack.c.l.b16 %v2375
    %v2575 = vunpack.c.l.b16 %v2376
    %v2576 = vunpack.c.l.b16 %v2377
    %v2577 = vunpack.c.l.b16 %v2378
    %v2578 = vunpack.c.l.b16 %v2379
    %v2579 = vunpack.c.l.b16 %v2380
    %v2580 = vunpack.c.l.b16 %v2381
    %v2581 = vunpack.c.l.b16 %v2382
    %v2582 = vpack.c.b16 %v2487, %v2486
    %v2583 = vpack.c.b16 %v2489, %v2488
    %v2584 = vpack.c.b16 %v2491, %v2490
    %v2585 = vpack.c.b16 %v2493, %v2492
    %v2586 = vpack.c.b16 %v2495, %v2494
    %v2587 = vpack.c.b16 %v2497, %v2496
    %v2588 = vpack.c.b16 %v2499, %v2498
    %v2589 = vpack.c.b16 %v2501, %v2500
    %v2590 = vpack.c.b16 %v2503, %v2502
    %v2591 = vpack.c.b16 %v2505, %v2504
    %v2592 = vpack.c.b16 %v2507, %v2506
    %v2593 = vpack.c.b16 %v2509, %v2508
    %v2594 = vpack.c.b16 %v2511, %v2510
    %v2595 = vpack.c.b16 %v2513, %v2512
    %v2596 = vpack.c.b16 %v2515, %v2514
    %v2597 = vpack.c.b16 %v2517, %v2516
    %v2598 = vpack.c.b16 %v2519, %v2518
    %v2599 = vpack.c.b16 %v2521, %v2520
    %v2600 = vpack.c.b16 %v2523, %v2522
    %v2601 = vpack.c.b16 %v2525, %v2524
    %v2602 = vpack.c.b16 %v2527, %v2526
    %v2603 = vpack.c.b16 %v2529, %v2528
    %v2604 = vpack.c.b16 %v2531, %v2530
    %v2605 = vpack.c.b16 %v2533, %v2532
    %v2606 = vpack.c.b16 %v2535, %v2534
    %v2607 = vpack.c.b16 %v2537, %v2536
    %v2608 = vpack.c.b16 %v2539, %v2538
    %v2609 = vpack.c.b16 %v2541, %v2540
    %v2610 = vpack.c.b16 %v2543, %v2542
    %v2611 = vpack.c.b16 %v2545, %v2544
    %v2612 = vpack.c.b16 %v2547, %v2546
    %v2613 = vpack.c.b16 %v2549, %v2548
    %v2614 = vpack.c.b16 %v2551, %v2550
    %v2615 = vpack.c.b16 %v2553, %v2552
    %v2616 = vpack.c.b16 %v2555, %v2554
    %v2617 = vpack.c.b16 %v2557, %v2556
    %v2618 = vpack.c.b16 %v2559, %v2558
    %v2619 = vpack.c.b16 %v2561, %v2560
    %v2620 = vpack.c.b16 %v2563, %v2562
    %v2621 = vpack.c.b16 %v2565, %v2564
    %v2622 = vpack.c.b16 %v2567, %v2566
    %v2623 = vpack.c.b16 %v2569, %v2568
    %v2624 = vpack.c.b16 %v2571, %v2570
    %v2625 = vpack.c.b16 %v2573, %v2572
    %v2626 = vpack.c.b16 %v2575, %v2574
    %v2627 = vpack.c.b16 %v2577, %v2576
    %v2628 = vpack.c.b16 %v2579, %v2578
    %v2629 = vpack.c.b16 %v2581, %v2580
    %2678 = vmatprep.subr.bf16.mxu0 0
    %2679 = vmatpush1.bf16.msra.mxu0 %v2589
    %2680 = vmatprep.subr.bf16.mxu0 0
    %2681 = vmatpush1.bf16.msra.mxu0 %v2588
    %2682 = vmatprep.subr.bf16.mxu0 0
    %2683 = vmatpush1.bf16.msra.mxu0 %v2587
    %2684 = vmatprep.subr.bf16.mxu0 0
    %2685 = vmatpush1.bf16.msra.mxu0 %v2586
    %2686 = vmatprep.subr.bf16.mxu0 0
    %2687 = vmatpush1.bf16.msra.mxu0 %v2585
    %2688 = vmatprep.subr.bf16.mxu0 0
    %2689 = vmatpush1.bf16.msra.mxu0 %v2584
    %2690 = vmatprep.subr.bf16.mxu0 0
    %2691 = vmatpush1.bf16.msra.mxu0 %v2583
    %2692 = vmatprep.subr.bf16.mxu0 0
    %2693 = vmatpush1.bf16.msra.mxu0 %v2582
    %2694 = vmatprep.subr.bf16.mxu0 0
    %2695 = vmatpush2.bf16.msra.mxu0 %v2597
    %2696 = vmatprep.subr.bf16.mxu0 0
    %2697 = vmatpush2.bf16.msra.mxu0 %v2596
    %2698 = vmatprep.subr.bf16.mxu0 0
    %2699 = vmatpush2.bf16.msra.mxu0 %v2595
    %2700 = vmatprep.subr.bf16.mxu0 0
    %2701 = vmatpush2.bf16.msra.mxu0 %v2594
    %2702 = vmatprep.subr.bf16.mxu0 0
    %2703 = vmatpush2.bf16.msra.mxu0 %v2593
    %2704 = vmatprep.subr.bf16.mxu0 0
    %2705 = vmatpush2.bf16.msra.mxu0 %v2592
    %2706 = vmatprep.subr.bf16.mxu0 0
    %2707 = vmatpush2.bf16.msra.mxu0 %v2591
    %2708 = vmatprep.subr.bf16.mxu0 0
    %2709 = vmatpush2.bf16.msra.mxu0 %v2590
    %2710 = vmatprep.mubr.bf16.mxu0 %v2282
    %2711 = vmatmul.mubr.bf16.gmra.mxu0 %v2281
    %v2712 = vpop.f32.mrf.mxu0
    %v2713 = vadd.f32 %v2388, %v2712
    %v2714 = vpop.f32.mrf.mxu0
    %v2715 = vpop.f32.mrf.mxu0
    %v2716 = vadd.f32 %v2388, %v2715
    %v2717 = vpop.f32.mrf.mxu0
    %2718 = vdwg.mxu0
    %2719 = vmatprep.subr.bf16.mxu0 0
    %2720 = vmatpush1.bf16.msra.mxu0 %v2605
    %2721 = vmatprep.subr.bf16.mxu0 0
    %2722 = vmatpush1.bf16.msra.mxu0 %v2604
    %2723 = vmatprep.subr.bf16.mxu0 0
    %2724 = vmatpush1.bf16.msra.mxu0 %v2603
    %2725 = vmatprep.subr.bf16.mxu0 0
    %2726 = vmatpush1.bf16.msra.mxu0 %v2602
    %2727 = vmatprep.subr.bf16.mxu0 0
    %2728 = vmatpush1.bf16.msra.mxu0 %v2601
    %2729 = vmatprep.subr.bf16.mxu0 0
    %2730 = vmatpush1.bf16.msra.mxu0 %v2600
    %2731 = vmatprep.subr.bf16.mxu0 0
    %2732 = vmatpush1.bf16.msra.mxu0 %v2599
    %2733 = vmatprep.subr.bf16.mxu0 0
    %2734 = vmatpush1.bf16.msra.mxu0 %v2598
    %2735 = vmatprep.subr.bf16.mxu0 0
    %2736 = vmatpush2.bf16.msra.mxu0 %v2613
    %2737 = vmatprep.subr.bf16.mxu0 0
    %2738 = vmatpush2.bf16.msra.mxu0 %v2612
    %2739 = vmatprep.subr.bf16.mxu0 0
    %2740 = vmatpush2.bf16.msra.mxu0 %v2611
    %2741 = vmatprep.subr.bf16.mxu0 0
    %2742 = vmatpush2.bf16.msra.mxu0 %v2610
    %2743 = vmatprep.subr.bf16.mxu0 0
    %2744 = vmatpush2.bf16.msra.mxu0 %v2609
    %2745 = vmatprep.subr.bf16.mxu0 0
    %2746 = vmatpush2.bf16.msra.mxu0 %v2608
    %2747 = vmatprep.subr.bf16.mxu0 0
    %2748 = vmatpush2.bf16.msra.mxu0 %v2607
    %2749 = vmatprep.subr.bf16.mxu0 0
    %2750 = vmatpush2.bf16.msra.mxu0 %v2606
    %2751 = vmatprep.mubr.bf16.mxu0 %v2284
    %2752 = vmatmul.mubr.bf16.gmra.mxu0 %v2283
    %v2753 = vpop.f32.mrf.mxu0
    %v2754 = vadd.f32 %v2713, %v2753
    %v2755 = vpop.f32.mrf.mxu0
    %v2756 = vpop.f32.mrf.mxu0
    %v2757 = vadd.f32 %v2716, %v2756
    %v2758 = vpop.f32.mrf.mxu0
    %2759 = vdwg.mxu0
    %2760 = vmatprep.subr.bf16.mxu0 0
    %2761 = vmatpush1.bf16.msra.mxu0 %v2621
    %2762 = vmatprep.subr.bf16.mxu0 0
    %2763 = vmatpush1.bf16.msra.mxu0 %v2620
    %2764 = vmatprep.subr.bf16.mxu0 0
    %2765 = vmatpush1.bf16.msra.mxu0 %v2619
    %2766 = vmatprep.subr.bf16.mxu0 0
    %2767 = vmatpush1.bf16.msra.mxu0 %v2618
    %2768 = vmatprep.subr.bf16.mxu0 0
    %2769 = vmatpush1.bf16.msra.mxu0 %v2617
    %2770 = vmatprep.subr.bf16.mxu0 0
    %2771 = vmatpush1.bf16.msra.mxu0 %v2616
    %2772 = vmatprep.subr.bf16.mxu0 0
    %2773 = vmatpush1.bf16.msra.mxu0 %v2615
    %2774 = vmatprep.subr.bf16.mxu0 0
    %2775 = vmatpush1.bf16.msra.mxu0 %v2614
    %2776 = vmatprep.subr.bf16.mxu0 0
    %2777 = vmatpush2.bf16.msra.mxu0 %v2629
    %2778 = vmatprep.subr.bf16.mxu0 0
    %2779 = vmatpush2.bf16.msra.mxu0 %v2628
    %2780 = vmatprep.subr.bf16.mxu0 0
    %2781 = vmatpush2.bf16.msra.mxu0 %v2627
    %2782 = vmatprep.subr.bf16.mxu0 0
    %2783 = vmatpush2.bf16.msra.mxu0 %v2626
    %2784 = vmatprep.subr.bf16.mxu0 0
    %2785 = vmatpush2.bf16.msra.mxu0 %v2625
    %2786 = vmatprep.subr.bf16.mxu0 0
    %2787 = vmatpush2.bf16.msra.mxu0 %v2624
    %2788 = vmatprep.subr.bf16.mxu0 0
    %2789 = vmatpush2.bf16.msra.mxu0 %v2623
    %2790 = vmatprep.subr.bf16.mxu0 0
    %2791 = vmatpush2.bf16.msra.mxu0 %v2622
    %2792 = vmatprep.mubr.bf16.mxu0 %v2286
    %2793 = vmatmul.mubr.bf16.gmra.mxu0 %v2285
    %v2794 = vpop.f32.mrf.mxu0
    %v2795 = vadd.f32 %v2754, %v2794
    %v2796 = vpop.f32.mrf.mxu0
    %v2797 = vpop.f32.mrf.mxu0
    %v2798 = vadd.f32 %v2757, %v2797
    %v2799 = vpop.f32.mrf.mxu0
    %2800 = vdwg.mxu0
    %2801 = vst [vmem:[#allocation11] sm:$0xff] %v2795
    %2802 = vst [vmem:[#allocation11 + $0x8] sm:$0xff] %v2798
    // Predicated region
    $region42: #{tpu_custom_call.1} parent=1 // pred_check
      _
    $region43: #{tpu_custom_call.1} parent=1 // pred_check_branch
      %2804 = sbr.rel (0) target = $region45
    $region44: #{tpu_custom_call.1} parent=1 // pred_region
      %s2806 = ssub.s32 256, 256
      %2807 = vsyncadd [#allocation4], %s2806
      %s2808 = sshll.u32 [#allocation11], 4
      %s2809 = int_to_ptr.vmem [resolvable:$true] %s2808
      %2814 = dma.vmem_to_hbm [thread:$0]  %s2809, 256, %s5, [#allocation4], 128, 128, 8
    $region45: #{tpu_custom_call.1} parent=1 // pred_fallthru
      _
    // Predicated region
    $region46: #{tpu_custom_call.1} parent=1 // pred_check
      _
    $region47: #{tpu_custom_call.1} parent=1 // pred_check_branch
      %2816 = sbr.rel (0) target = $region49
    $region48: #{tpu_custom_call.1} parent=1 // pred_region
      %2817 = dma.done [#allocation4], 256
    $region49: #{tpu_custom_call.1} parent=1 // pred_fallthru
      _
    %2818 = vsyncpa [#allocation3], 1
    %2819 = vsyncpa [#allocation6], 1
    %2820 = vsyncpa [#allocation9], 1
    %2821 = vsyncpa [#allocation4], 1

</llo_original>
